<compile_context>
chip_gen: v7x
topology: tpu7x:2x2x1
jax: 0.10.0
libtpu: 0.0.40
codegen_flags: <defaults>
</compile_context>

<pallas_src>
import functools

import jax
import jax.numpy as jnp
from jax.experimental import pallas as pl
from jax.experimental.pallas import tpu as pltpu

_LANE = 128


def _round_up(x, m):
    return (x + m - 1) // m * m


# ----------------------------- Pallas kernels -----------------------------

def _conv_stem_kernel(p_ref, w_ref, b_ref, o_ref):
    # p: (TILE_P, K_pad) bf16 im2col patches, w: (K_pad, C_pad) bf16,
    # b: (1, C_pad) f32.  One MXU pass + f32 bias/ReLU epilogue, bf16 store.
    acc = jnp.dot(p_ref[...], w_ref[...], preferred_element_type=jnp.float32)
    o_ref[...] = jnp.maximum(acc + b_ref[...], 0.0).astype(o_ref.dtype)


def _gap_fc_heads_kernel(x_ref, fcw_ref, fcb_ref, hw_ref, hb_ref, o_ref, *,
                         logit_col):
    # x: (N, HW, C_pad) bf16 stem feature map (post-ReLU)
    # fcw: (C_pad, F_pad) bf16, fcb: (1, F_pad) f32      (stand-in backbone FC)
    # hw: (F_pad, 128) bf16 fused head weights, hb: (1, 128) f32
    # out: (N, 128) f32 slab — cols [0, logit_col) = bbox, col logit_col = pm.
    x = x_ref[...].astype(jnp.float32)
    pooled = jnp.mean(x, axis=1)                       # GAP over sublane axis
    feat = (jnp.dot(pooled.astype(jnp.bfloat16), fcw_ref[...],
                    preferred_element_type=jnp.float32) + fcb_ref[...])
    out = (jnp.dot(feat.astype(jnp.bfloat16), hw_ref[...],
                   preferred_element_type=jnp.float32) + hb_ref[...])
    col = jax.lax.broadcasted_iota(jnp.int32, out.shape, 1)
    o_ref[...] = jnp.where(col == logit_col, jax.nn.sigmoid(out), out)


# ----------------------------- JAX glue ------------------------------------

def _im2col(x, k, stride, pad):
    """x: (N, C, H, W) -> patches (N*OH*OW, C*k*k), channel-major columns."""
    n, c, h, w = x.shape
    oh = (h + 2 * pad - k) // stride + 1
    ow = (w + 2 * pad - k) // stride + 1
    patches = jax.lax.conv_general_dilated_patches(
        x, (k, k), (stride, stride),
        padding=((pad, pad), (pad, pad)),
        dimension_numbers=("NCHW", "OIHW", "NCHW"),
    )  # (N, C*k*k, OH, OW)
    patches = patches.transpose(0, 2, 3, 1).reshape(n * oh * ow, c * k * k)
    return patches, oh, ow


def init_params(key, in_channels=3, bbox_dim=4, stem_out=64, feat_dim=1000):
    ks = jax.random.split(key, 8)
    scale = 0.02
    return {
        # stem conv: Conv2d(in_channels, 64, kernel=7, stride=2, pad=3)
        "stem_w": (jax.random.normal(ks[0], (stem_out, in_channels, 7, 7),
                                     jnp.float32) * scale),
        "stem_b": jnp.zeros((1, stem_out), jnp.float32),
        # stand-in backbone FC: 64 -> 1000
        "fc_w": jax.random.normal(ks[1], (stem_out, feat_dim), jnp.float32) * scale,
        "fc_b": jnp.zeros((1, feat_dim), jnp.float32),
        # bbox head: Linear(1000, 4)
        "bbox_w": jax.random.normal(ks[2], (feat_dim, bbox_dim), jnp.float32) * scale,
        "bbox_b": jnp.zeros((1, bbox_dim), jnp.float32),
        # proper_mask head: Linear(1004, 1) split into feature / bbox halves
        "pm_w_feat": jax.random.normal(ks[3], (feat_dim, 1), jnp.float32) * scale,
        "pm_w_bbox": jax.random.normal(ks[4], (bbox_dim, 1), jnp.float32) * scale,
        "pm_b": jnp.zeros((1, 1), jnp.float32),
    }


def mask_detector_forward(img, params):
    """img: (N, 3, H, W) float32.  Returns (bbox (N,4), proper_mask (N,))."""
    n = img.shape[0]
    stem_out = params["stem_w"].shape[0]
    bbox_dim = params["bbox_w"].shape[1]
    feat_dim = params["fc_w"].shape[1]

    # ---- im2col in bf16 (MXU-native dtype, halves HBM traffic) ----
    patches, oh, ow = _im2col(img.astype(jnp.bfloat16), k=7, stride=2, pad=3)
    p_rows, ckk = patches.shape

    # Lane/MXU-aligned padded sizes.
    k_pad = _round_up(ckk, 256)               # 147 -> 256 contraction dim
    c_pad = _round_up(stem_out, _LANE)        # 64  -> 128 lane-dense output
    tile_p = min(1024, _round_up(p_rows, 256))  # fits v7x VMEM double-buffered
    p_pad = _round_up(p_rows, tile_p)

    patches_p = jnp.pad(patches, ((0, p_pad - p_rows), (0, k_pad - ckk)))
    w_flat = params["stem_w"].reshape(stem_out, ckk).T          # (C*49, 64)
    w_p = jnp.pad(w_flat, ((0, k_pad - ckk), (0, c_pad - stem_out))
                  ).astype(jnp.bfloat16)
    b_p = jnp.pad(params["stem_b"], ((0, 0), (0, c_pad - stem_out)))

    # ---- kernel 1: tiled stem conv as im2col matmul + ReLU ----
    conv = pl.pallas_call(
        _conv_stem_kernel,
        out_shape=jax.ShapeDtypeStruct((p_pad, c_pad), jnp.bfloat16),
        grid=(p_pad // tile_p,),
        in_specs=[
            pl.BlockSpec((tile_p, k_pad), lambda i: (i, 0)),
            pl.BlockSpec((k_pad, c_pad), lambda i: (0, 0)),
            pl.BlockSpec((1, c_pad), lambda i: (0, 0)),
        ],
        out_specs=pl.BlockSpec((tile_p, c_pad), lambda i: (i, 0)),
        compiler_params=pltpu.CompilerParams(
            dimension_semantics=("parallel",),
            vmem_limit_bytes=32 * 1024 * 1024),
    )(patches_p, w_p, b_p)

    # No transpose: keep (N, HW, C_pad); GAP is a sublane-axis reduce in-kernel.
    feat_map = conv[:p_rows].reshape(n, oh * ow, c_pad)

    # ---- algebraically fold the two heads into one matmul ----
    #   bbox   = f @ Wb + bb
    #   logits = f @ Wpf + bbox @ Wpb + bp
    #          = f @ (Wpf + Wb @ Wpb) + (bb @ Wpb + bp)
    wb, bb = params["bbox_w"], params["bbox_b"]
    wpf, wpb, bp = params["pm_w_feat"], params["pm_w_bbox"], params["pm_b"]
    w_heads = jnp.concatenate([wb, wpf + wb @ wpb], axis=1)   # (feat, bbox_dim+1)
    b_heads = jnp.concatenate([bb, bb @ wpb + bp], axis=1)    # (1, bbox_dim+1)

    f_pad = _round_up(feat_dim, _LANE)                         # 1000 -> 1024
    fcw_p = jnp.pad(params["fc_w"],
                    ((0, c_pad - stem_out), (0, f_pad - feat_dim))
                    ).astype(jnp.bfloat16)
    fcb_p = jnp.pad(params["fc_b"], ((0, 0), (0, f_pad - feat_dim)))
    hw_p = jnp.pad(w_heads,
                   ((0, f_pad - feat_dim), (0, _LANE - (bbox_dim + 1)))
                   ).astype(jnp.bfloat16)
    hb_p = jnp.pad(b_heads, ((0, 0), (0, _LANE - (bbox_dim + 1))))

    # ---- kernel 2: fused GAP + FC + heads, single lane-dense output slab ----
    vmem = pl.BlockSpec(memory_space=pltpu.MemorySpace.VMEM)
    slab = pl.pallas_call(
        functools.partial(_gap_fc_heads_kernel, logit_col=bbox_dim),
        out_shape=jax.ShapeDtypeStruct((n, _LANE), jnp.float32),
        in_specs=[vmem] * 5,
        out_specs=vmem,
        compiler_params=pltpu.CompilerParams(
            vmem_limit_bytes=32 * 1024 * 1024),
    )(feat_map, fcw_p, fcb_p, hw_p, hb_p)

    bbox = slab[:, :bbox_dim]
    # torch .squeeze(): drop all size-1 dims -> (N,) (scalar when N == 1)
    proper_mask = jnp.squeeze(slab[:, bbox_dim:bbox_dim + 1])
    return bbox, proper_mask


# ----------------------------- main -----------------------------------------

if __name__ == "__main__":
    key = jax.random.PRNGKey(0)
    k_img, k_params = jax.random.split(key)

    # Small NCHW image consistent with in_channels=3.
    img = jax.random.normal(k_img, (2, 3, 16, 16), jnp.float32)
    params = init_params(k_params)

    bbox, proper_mask = jax.jit(mask_detector_forward)(img, params)
    jax.block_until_ready((bbox, proper_mask))

    assert bbox.shape == (2, 4) and bbox.dtype == jnp.float32
    assert proper_mask.shape == (2,) and proper_mask.dtype == jnp.float32
    assert bool(jnp.all(jnp.isfinite(bbox)))
    assert bool(jnp.all((proper_mask >= 0.0) & (proper_mask <= 1.0)))
    print("KERNEL_OK")
</pallas_src>

<mosaic_0001>
module attributes {stable_mosaic.version = 11 : i64} {
  func.func @_conv_stem_kernel(%arg0: i32, %arg1: memref<256x256xbf16, #tpu.memory_space<vmem>>, %arg2: memref<256x128xbf16, #tpu.memory_space<vmem>>, %arg3: memref<1x128xf32, #tpu.memory_space<vmem>>, %arg4: memref<256x128xbf16, #tpu.memory_space<vmem>>) attributes {dimension_semantics = [#tpu.dimension_semantics<parallel>], iteration_bounds = array<i64: 1>, scalar_prefetch = 0 : i64, scratch_operands = 0 : i64, tpu.core_type = #tpu.core_type<tc>, window_params = [{transform_indices = @transform_0, window_bounds = array<i64: 256, 256>}, {pipeline_mode = #tpu.pipeline_mode<synchronous>, transform_indices = @transform_1, window_bounds = array<i64: 256, 128>}, {pipeline_mode = #tpu.pipeline_mode<synchronous>, transform_indices = @transform_2, window_bounds = array<i64: 1, 128>}, {transform_indices = @transform_3, window_bounds = array<i64: 256, 128>}]} {
    %c0 = arith.constant 0 : index
    %c0_0 = arith.constant 0 : index
    %0 = vector.load %arg1[%c0, %c0_0] : memref<256x256xbf16, #tpu.memory_space<vmem>>, vector<256x256xbf16>
    %c0_1 = arith.constant 0 : index
    %c0_2 = arith.constant 0 : index
    %1 = vector.load %arg2[%c0_1, %c0_2] : memref<256x128xbf16, #tpu.memory_space<vmem>>, vector<256x128xbf16>
    %cst = arith.constant dense<0.000000e+00> : vector<256x128xf32>
    %2 = tpu.matmul %0, %1, %cst {dimension_numbers = #tpu.dot_dimension_numbers<[1], [0], [0], [1], [0, 0, 1, 1], [], []>} : vector<256x256xbf16>, vector<256x128xbf16>, vector<256x128xf32> -> vector<256x128xf32>
    %c0_3 = arith.constant 0 : index
    %c0_4 = arith.constant 0 : index
    %3 = vector.load %arg3[%c0_3, %c0_4] : memref<1x128xf32, #tpu.memory_space<vmem>>, vector<1x128xf32>
    %4 = vector.broadcast %3 : vector<1x128xf32> to vector<256x128xf32>
    %5 = arith.addf %2, %4 : vector<256x128xf32>
    %cst_5 = arith.constant 0.000000e+00 : f32
    %6 = vector.broadcast %cst_5 : f32 to vector<256x128xf32>
    %7 = arith.maximumf %5, %6 : vector<256x128xf32>
    %8 = arith.truncf %7 : vector<256x128xf32> to vector<256x128xbf16>
    %c0_6 = arith.constant 0 : index
    %c0_7 = arith.constant 0 : index
    %9 = vector.load %arg4[%c0_6, %c0_7] : memref<256x128xbf16, #tpu.memory_space<vmem>>, vector<256x128xbf16>
    tpu.vector_store %arg4[%c0_6, %c0_7], %8 {strides = array<i32>} : memref<256x128xbf16, #tpu.memory_space<vmem>>, vector<256x128xbf16>,
    return
  }
  func.func @transform_0(%arg0: i32) -> (i32, i32) {
    %c0_i32 = arith.constant 0 : i32
    %c0_i32_0 = arith.constant 0 : i32
    return %arg0, %c0_i32 : i32, i32
  }
  func.func @transform_1(%arg0: i32) -> (i32, i32) {
    %c0_i32 = arith.constant 0 : i32
    %c0_i32_0 = arith.constant 0 : i32
    %c0_i32_1 = arith.constant 0 : i32
    return %c0_i32, %c0_i32_0 : i32, i32
  }
  func.func @transform_2(%arg0: i32) -> (i32, i32) {
    %c0_i32 = arith.constant 0 : i32
    %c0_i32_0 = arith.constant 0 : i32
    %c0_i32_1 = arith.constant 0 : i32
    return %c0_i32, %c0_i32_0 : i32, i32
  }
  func.func @transform_3(%arg0: i32) -> (i32, i32) {
    %c0_i32 = arith.constant 0 : i32
    %c0_i32_0 = arith.constant 0 : i32
    return %arg0, %c0_i32 : i32, i32
  }
}

module attributes {stable_mosaic.version = 11 : i64} {
  func.func @_gap_fc_heads_kernel(%arg0: memref<2x64x128xbf16, #tpu.memory_space<vmem>>, %arg1: memref<128x1024xbf16, #tpu.memory_space<vmem>>, %arg2: memref<1x1024xf32, #tpu.memory_space<vmem>>, %arg3: memref<1024x128xbf16, #tpu.memory_space<vmem>>, %arg4: memref<1x128xf32, #tpu.memory_space<vmem>>, %arg5: memref<2x128xf32, #tpu.memory_space<vmem>>) attributes {dimension_semantics = [], scalar_prefetch = 0 : i64, scratch_operands = 0 : i64, tpu.core_type = #tpu.core_type<tc>} {
    %c0 = arith.constant 0 : index
    %c0_0 = arith.constant 0 : index
    %c0_1 = arith.constant 0 : index
    %0 = vector.load %arg0[%c0, %c0_0, %c0_1] : memref<2x64x128xbf16, #tpu.memory_space<vmem>>, vector<2x64x128xbf16>
    %1 = arith.extf %0 : vector<2x64x128xbf16> to vector<2x64x128xf32>
    %cst = arith.constant dense<0.000000e+00> : vector<2x128xf32>
    %2 = vector.multi_reduction <add>, %1, %cst [1] : vector<2x64x128xf32> to vector<2x128xf32>
    %cst_2 = arith.constant 6.400000e+01 : f32
    %3 = vector.broadcast %cst_2 : f32 to vector<2x128xf32>
    %4 = arith.divf %2, %3 : vector<2x128xf32>
    %5 = arith.truncf %4 : vector<2x128xf32> to vector<2x128xbf16>
    %c0_3 = arith.constant 0 : index
    %c0_4 = arith.constant 0 : index
    %6 = vector.load %arg1[%c0_3, %c0_4] : memref<128x1024xbf16, #tpu.memory_space<vmem>>, vector<128x1024xbf16>
    %cst_5 = arith.constant dense<0.000000e+00> : vector<2x1024xf32>
    %7 = tpu.matmul %5, %6, %cst_5 {dimension_numbers = #tpu.dot_dimension_numbers<[1], [0], [0], [1], [0, 0, 1, 1], [], []>} : vector<2x128xbf16>, vector<128x1024xbf16>, vector<2x1024xf32> -> vector<2x1024xf32>
    %c0_6 = arith.constant 0 : index
    %c0_7 = arith.constant 0 : index
    %8 = vector.load %arg2[%c0_6, %c0_7] : memref<1x1024xf32, #tpu.memory_space<vmem>>, vector<1x1024xf32>
    %9 = vector.broadcast %8 : vector<1x1024xf32> to vector<2x1024xf32>
    %10 = arith.addf %7, %9 : vector<2x1024xf32>
    %11 = arith.truncf %10 : vector<2x1024xf32> to vector<2x1024xbf16>
    %c0_8 = arith.constant 0 : index
    %c0_9 = arith.constant 0 : index
    %12 = vector.load %arg3[%c0_8, %c0_9] : memref<1024x128xbf16, #tpu.memory_space<vmem>>, vector<1024x128xbf16>
    %cst_10 = arith.constant dense<0.000000e+00> : vector<2x128xf32>
    %13 = tpu.matmul %11, %12, %cst_10 {dimension_numbers = #tpu.dot_dimension_numbers<[1], [0], [0], [1], [0, 0, 1, 1], [], []>} : vector<2x1024xbf16>, vector<1024x128xbf16>, vector<2x128xf32> -> vector<2x128xf32>
    %c0_11 = arith.constant 0 : index
    %c0_12 = arith.constant 0 : index
    %14 = vector.load %arg4[%c0_11, %c0_12] : memref<1x128xf32, #tpu.memory_space<vmem>>, vector<1x128xf32>
    %15 = vector.broadcast %14 : vector<1x128xf32> to vector<2x128xf32>
    %16 = arith.addf %13, %15 : vector<2x128xf32>
    %17 = tpu.iota {dimensions = array<i32: 1>} : vector<2x128xi32>
    %c4_i32 = arith.constant 4 : i32
    %18 = vector.broadcast %c4_i32 : i32 to vector<2x128xi32>
    %19 = arith.cmpi eq, %17, %18 : vector<2x128xi32>
    %20 = arith.negf %16 : vector<2x128xf32>
    %21 = math.exp %20 : vector<2x128xf32>
    %cst_13 = arith.constant 1.000000e+00 : f32
    %22 = vector.broadcast %cst_13 : f32 to vector<2x128xf32>
    %23 = arith.addf %22, %21 : vector<2x128xf32>
    %24 = arith.divf %22, %23 : vector<2x128xf32>
    %25 = arith.select %19, %24, %16 : vector<2x128xi1>, vector<2x128xf32>
    %c0_14 = arith.constant 0 : index
    %c0_15 = arith.constant 0 : index
    %26 = vector.load %arg5[%c0_14, %c0_15] : memref<2x128xf32, #tpu.memory_space<vmem>>, vector<2x128xf32>
    tpu.vector_store %arg5[%c0_14, %c0_15], %25 {strides = array<i32>} : memref<2x128xf32, #tpu.memory_space<vmem>>, vector<2x128xf32>,
    return
  }
}

</mosaic_0001>

<llo_original>
// kernel: mask_detector_forward.2
$region0: #{mask_detector_forward.2}
  #allocation0 [shape = 'u32[]', space=smem, size = 0x4, offset = 0x4, fixed_abs, tag = 'smem constant byte address 0x4 - core index']
  #allocation1 [shape = 'u32[144,128]{1,0:T(1,128)}', space=vmem, size = 0x12000, scoped, tag = 'internal scratch']
  %s0 = inlined_call_operand.vmem [shape: bf16[256,256], index: 0, kind: input, shape index: {}]
  %s1 = inlined_call_operand.vmem [shape: bf16[256,128], index: 1, kind: input, shape index: {}]
  %s2 = inlined_call_operand.vmem [shape: f32[1,128], index: 2, kind: input, shape index: {}]
  %s3 = inlined_call_operand.vmem [shape: bf16[256,128], index: 3, kind: output, shape index: {}]
  %s4 = sld [smem:[#allocation0]]
  $region22: #{mask_detector_forward.2} parent=0
    _
  %s6 = ssub.s32 1, %s4
  %s7 = scalar_select 0, %s6, %s4
  // Predicated region
  $region2: #{mask_detector_forward.2} parent=0 // pred_check
    _
  $region3: #{mask_detector_forward.2} parent=0 // pred_check_branch
    %9 = sbr.rel (0) target = $region5
  $region4: #{mask_detector_forward.2} parent=0 // pred_region
    _
  $region5: #{mask_detector_forward.2} parent=0 // pred_fallthru
    _
  // Predicated region
  $region6: #{mask_detector_forward.2} parent=0 // pred_check
    _
  $region7: #{mask_detector_forward.2} parent=0 // pred_check_branch
    %11 = sbr.rel (0) target = $region9
  $region8: #{mask_detector_forward.2} parent=0 // pred_region
    _
  $region9: #{mask_detector_forward.2} parent=0 // pred_fallthru
    _
  // Predicated region
  $region10: #{mask_detector_forward.2} parent=0 // pred_check
    _
  $region11: #{mask_detector_forward.2} parent=0 // pred_check_branch
    %13 = sbr.rel (0) target = $region13
  $region12: #{mask_detector_forward.2} parent=0 // pred_region
    _
  $region13: #{mask_detector_forward.2} parent=0 // pred_fallthru
    _
  %v15 = vld [vmem:[%s0] sm:$0xff]
  %v16 = vld [vmem:[%s0 + $0x8] sm:$0xff]
  %v17 = vld [vmem:[%s0 + $0x10] sm:$0xff]
  %v18 = vld [vmem:[%s0 + $0x18] sm:$0xff]
  %v19 = vld [vmem:[%s0 + $0x20] sm:$0xff]
  %v20 = vld [vmem:[%s0 + $0x28] sm:$0xff]
  %v21 = vld [vmem:[%s0 + $0x30] sm:$0xff]
  %v22 = vld [vmem:[%s0 + $0x38] sm:$0xff]
  %v23 = vld [vmem:[%s0 + $0x40] sm:$0xff]
  %v24 = vld [vmem:[%s0 + $0x48] sm:$0xff]
  %v25 = vld [vmem:[%s0 + $0x50] sm:$0xff]
  %v26 = vld [vmem:[%s0 + $0x58] sm:$0xff]
  %v27 = vld [vmem:[%s0 + $0x60] sm:$0xff]
  %v28 = vld [vmem:[%s0 + $0x68] sm:$0xff]
  %v29 = vld [vmem:[%s0 + $0x70] sm:$0xff]
  %v30 = vld [vmem:[%s0 + $0x78] sm:$0xff]
  %v31 = vld [vmem:[%s0 + $0x80] sm:$0xff]
  %v32 = vld [vmem:[%s0 + $0x88] sm:$0xff]
  %v33 = vld [vmem:[%s0 + $0x90] sm:$0xff]
  %v34 = vld [vmem:[%s0 + $0x98] sm:$0xff]
  %v35 = vld [vmem:[%s0 + $0xa0] sm:$0xff]
  %v36 = vld [vmem:[%s0 + $0xa8] sm:$0xff]
  %v37 = vld [vmem:[%s0 + $0xb0] sm:$0xff]
  %v38 = vld [vmem:[%s0 + $0xb8] sm:$0xff]
  %v39 = vld [vmem:[%s0 + $0xc0] sm:$0xff]
  %v40 = vld [vmem:[%s0 + $0xc8] sm:$0xff]
  %v41 = vld [vmem:[%s0 + $0xd0] sm:$0xff]
  %v42 = vld [vmem:[%s0 + $0xd8] sm:$0xff]
  %v43 = vld [vmem:[%s0 + $0xe0] sm:$0xff]
  %v44 = vld [vmem:[%s0 + $0xe8] sm:$0xff]
  %v45 = vld [vmem:[%s0 + $0xf0] sm:$0xff]
  %v46 = vld [vmem:[%s0 + $0xf8] sm:$0xff]
  %v47 = vld [vmem:[%s1] sm:$0xf]
  %v48 = vld [vmem:[%s1 + $0x4] sm:$0xf]
  %v49 = vld [vmem:[%s1 + $0x8] sm:$0xf]
  %v50 = vld [vmem:[%s1 + $0xc] sm:$0xf]
  %v51 = vld [vmem:[%s1 + $0x10] sm:$0xf]
  %v52 = vld [vmem:[%s1 + $0x14] sm:$0xf]
  %v53 = vld [vmem:[%s1 + $0x18] sm:$0xf]
  %v54 = vld [vmem:[%s1 + $0x1c] sm:$0xf]
  %v55 = vld [vmem:[%s1 + $0x20] sm:$0xf]
  %v56 = vld [vmem:[%s1 + $0x24] sm:$0xf]
  %v57 = vld [vmem:[%s1 + $0x28] sm:$0xf]
  %v58 = vld [vmem:[%s1 + $0x2c] sm:$0xf]
  %v59 = vld [vmem:[%s1 + $0x30] sm:$0xf]
  %v60 = vld [vmem:[%s1 + $0x34] sm:$0xf]
  %v61 = vld [vmem:[%s1 + $0x38] sm:$0xf]
  %v62 = vld [vmem:[%s1 + $0x3c] sm:$0xf]
  %v63 = vld [vmem:[%s1 + $0x40] sm:$0xf]
  %v64 = vld [vmem:[%s1 + $0x44] sm:$0xf]
  %v65 = vld [vmem:[%s1 + $0x48] sm:$0xf]
  %v66 = vld [vmem:[%s1 + $0x4c] sm:$0xf]
  %v67 = vld [vmem:[%s1 + $0x50] sm:$0xf]
  %v68 = vld [vmem:[%s1 + $0x54] sm:$0xf]
  %v69 = vld [vmem:[%s1 + $0x58] sm:$0xf]
  %v70 = vld [vmem:[%s1 + $0x5c] sm:$0xf]
  %v71 = vld [vmem:[%s1 + $0x60] sm:$0xf]
  %v72 = vld [vmem:[%s1 + $0x64] sm:$0xf]
  %v73 = vld [vmem:[%s1 + $0x68] sm:$0xf]
  %v74 = vld [vmem:[%s1 + $0x6c] sm:$0xf]
  %v75 = vld [vmem:[%s1 + $0x70] sm:$0xf]
  %v76 = vld [vmem:[%s1 + $0x74] sm:$0xf]
  %v77 = vld [vmem:[%s1 + $0x78] sm:$0xf]
  %v78 = vld [vmem:[%s1 + $0x7c] sm:$0xf]
  %v79 = vld [vmem:[%s2] sm:$0x1]
  %v81 = vlaneseq
  %v82 = vshrl.u32 %v81, 7
  %v83 = vsub.s32 0, %v82
  %v84 = vrot.slane %v79, %v83
  %v118 = vunpack.c.l.b16 %v15
  %v119 = vunpack.c.h.b16 %v15
  %v120 = vunpack.c.l.b16 %v16
  %v121 = vunpack.c.h.b16 %v16
  %v122 = vunpack.c.l.b16 %v17
  %v123 = vunpack.c.h.b16 %v17
  %v124 = vunpack.c.l.b16 %v18
  %v125 = vunpack.c.h.b16 %v18
  %v126 = vunpack.c.l.b16 %v19
  %v127 = vunpack.c.h.b16 %v19
  %v128 = vunpack.c.l.b16 %v20
  %v129 = vunpack.c.h.b16 %v20
  %v130 = vunpack.c.l.b16 %v21
  %v131 = vunpack.c.h.b16 %v21
  %v132 = vunpack.c.l.b16 %v22
  %v133 = vunpack.c.h.b16 %v22
  %v134 = vunpack.c.l.b16 %v23
  %v135 = vunpack.c.h.b16 %v23
  %v136 = vunpack.c.l.b16 %v24
  %v137 = vunpack.c.h.b16 %v24
  %v138 = vunpack.c.l.b16 %v25
  %v139 = vunpack.c.h.b16 %v25
  %v140 = vunpack.c.l.b16 %v26
  %v141 = vunpack.c.h.b16 %v26
  %v142 = vunpack.c.l.b16 %v27
  %v143 = vunpack.c.h.b16 %v27
  %v144 = vunpack.c.l.b16 %v28
  %v145 = vunpack.c.h.b16 %v28
  %v146 = vunpack.c.l.b16 %v29
  %v147 = vunpack.c.h.b16 %v29
  %v148 = vunpack.c.l.b16 %v30
  %v149 = vunpack.c.h.b16 %v30
  %v150 = vunpack.c.l.b16 %v31
  %v151 = vunpack.c.h.b16 %v31
  %v152 = vunpack.c.l.b16 %v32
  %v153 = vunpack.c.h.b16 %v32
  %v154 = vunpack.c.l.b16 %v33
  %v155 = vunpack.c.h.b16 %v33
  %v156 = vunpack.c.l.b16 %v34
  %v157 = vunpack.c.h.b16 %v34
  %v158 = vunpack.c.l.b16 %v35
  %v159 = vunpack.c.h.b16 %v35
  %v160 = vunpack.c.l.b16 %v36
  %v161 = vunpack.c.h.b16 %v36
  %v162 = vunpack.c.l.b16 %v37
  %v163 = vunpack.c.h.b16 %v37
  %v164 = vunpack.c.l.b16 %v38
  %v165 = vunpack.c.h.b16 %v38
  %v166 = vunpack.c.l.b16 %v39
  %v167 = vunpack.c.h.b16 %v39
  %v168 = vunpack.c.l.b16 %v40
  %v169 = vunpack.c.h.b16 %v40
  %v170 = vunpack.c.l.b16 %v41
  %v171 = vunpack.c.h.b16 %v41
  %v172 = vunpack.c.l.b16 %v42
  %v173 = vunpack.c.h.b16 %v42
  %v174 = vunpack.c.l.b16 %v43
  %v175 = vunpack.c.h.b16 %v43
  %v176 = vunpack.c.l.b16 %v44
  %v177 = vunpack.c.h.b16 %v44
  %v178 = vunpack.c.l.b16 %v45
  %v179 = vunpack.c.h.b16 %v45
  %v180 = vunpack.c.l.b16 %v46
  %v181 = vunpack.c.h.b16 %v46
  %v182 = vpack.c.b16 %v120, %v118
  %v183 = vpack.c.b16 %v121, %v119
  %v184 = vpack.c.b16 %v124, %v122
  %v185 = vpack.c.b16 %v125, %v123
  %v186 = vpack.c.b16 %v128, %v126
  %v187 = vpack.c.b16 %v129, %v127
  %v188 = vpack.c.b16 %v132, %v130
  %v189 = vpack.c.b16 %v133, %v131
  %v190 = vpack.c.b16 %v136, %v134
  %v191 = vpack.c.b16 %v137, %v135
  %v192 = vpack.c.b16 %v140, %v138
  %v193 = vpack.c.b16 %v141, %v139
  %v194 = vpack.c.b16 %v144, %v142
  %v195 = vpack.c.b16 %v145, %v143
  %v196 = vpack.c.b16 %v148, %v146
  %v197 = vpack.c.b16 %v149, %v147
  %v198 = vpack.c.b16 %v152, %v150
  %v199 = vpack.c.b16 %v153, %v151
  %v200 = vpack.c.b16 %v156, %v154
  %v201 = vpack.c.b16 %v157, %v155
  %v202 = vpack.c.b16 %v160, %v158
  %v203 = vpack.c.b16 %v161, %v159
  %v204 = vpack.c.b16 %v164, %v162
  %v205 = vpack.c.b16 %v165, %v163
  %v206 = vpack.c.b16 %v168, %v166
  %v207 = vpack.c.b16 %v169, %v167
  %v208 = vpack.c.b16 %v172, %v170
  %v209 = vpack.c.b16 %v173, %v171
  %v210 = vpack.c.b16 %v176, %v174
  %v211 = vpack.c.b16 %v177, %v175
  %v212 = vpack.c.b16 %v180, %v178
  %v213 = vpack.c.b16 %v181, %v179
  %v278 = vunpack.c.l.b16 %v47
  %v279 = vunpack.c.l.b16 %v48
  %v280 = vunpack.c.l.b16 %v49
  %v281 = vunpack.c.l.b16 %v50
  %v282 = vunpack.c.l.b16 %v51
  %v283 = vunpack.c.l.b16 %v52
  %v284 = vunpack.c.l.b16 %v53
  %v285 = vunpack.c.l.b16 %v54
  %v286 = vunpack.c.l.b16 %v55
  %v287 = vunpack.c.l.b16 %v56
  %v288 = vunpack.c.l.b16 %v57
  %v289 = vunpack.c.l.b16 %v58
  %v290 = vunpack.c.l.b16 %v59
  %v291 = vunpack.c.l.b16 %v60
  %v292 = vunpack.c.l.b16 %v61
  %v293 = vunpack.c.l.b16 %v62
  %v294 = vunpack.c.l.b16 %v63
  %v295 = vunpack.c.l.b16 %v64
  %v296 = vunpack.c.l.b16 %v65
  %v297 = vunpack.c.l.b16 %v66
  %v298 = vunpack.c.l.b16 %v67
  %v299 = vunpack.c.l.b16 %v68
  %v300 = vunpack.c.l.b16 %v69
  %v301 = vunpack.c.l.b16 %v70
  %v302 = vunpack.c.l.b16 %v71
  %v303 = vunpack.c.l.b16 %v72
  %v304 = vunpack.c.l.b16 %v73
  %v305 = vunpack.c.l.b16 %v74
  %v306 = vunpack.c.l.b16 %v75
  %v307 = vunpack.c.l.b16 %v76
  %v308 = vunpack.c.l.b16 %v77
  %v309 = vunpack.c.l.b16 %v78
  %v310 = vpack.c.b16 %v279, %v278
  %v311 = vpack.c.b16 %v281, %v280
  %v312 = vpack.c.b16 %v283, %v282
  %v313 = vpack.c.b16 %v285, %v284
  %v314 = vpack.c.b16 %v287, %v286
  %v315 = vpack.c.b16 %v289, %v288
  %v316 = vpack.c.b16 %v291, %v290
  %v317 = vpack.c.b16 %v293, %v292
  %v318 = vpack.c.b16 %v295, %v294
  %v319 = vpack.c.b16 %v297, %v296
  %v320 = vpack.c.b16 %v299, %v298
  %v321 = vpack.c.b16 %v301, %v300
  %v322 = vpack.c.b16 %v303, %v302
  %v323 = vpack.c.b16 %v305, %v304
  %v324 = vpack.c.b16 %v307, %v306
  %v325 = vpack.c.b16 %v309, %v308
  %342 = vmatprep.subr.bf16.mxu0 0
  %343 = vmatpush1.bf16.msra.mxu0 %v310
  %344 = vmatprep.subr.bf16.mxu0 0
  %345 = vmatpush1.bf16.msra.mxu0 %v311
  %346 = vmatprep.subr.bf16.mxu0 0
  %347 = vmatpush1.bf16.msra.mxu0 %v312
  %348 = vmatprep.subr.bf16.mxu0 0
  %349 = vmatpush1.bf16.msra.mxu0 %v313
  %350 = vmatprep.subr.bf16.mxu0 0
  %351 = vmatpush1.bf16.msra.mxu0 %v314
  %352 = vmatprep.subr.bf16.mxu0 0
  %353 = vmatpush1.bf16.msra.mxu0 %v315
  %354 = vmatprep.subr.bf16.mxu0 0
  %355 = vmatpush1.bf16.msra.mxu0 %v316
  %356 = vmatprep.subr.bf16.mxu0 0
  %357 = vmatpush1.bf16.msra.mxu0 %v317
  %358 = vmatprep.subr.bf16.mxu0 0
  %359 = vmatpush1.bf16.msra.mxu0 %v318
  %360 = vmatprep.subr.bf16.mxu0 0
  %361 = vmatpush1.bf16.msra.mxu0 %v319
  %362 = vmatprep.subr.bf16.mxu0 0
  %363 = vmatpush1.bf16.msra.mxu0 %v320
  %364 = vmatprep.subr.bf16.mxu0 0
  %365 = vmatpush1.bf16.msra.mxu0 %v321
  %366 = vmatprep.subr.bf16.mxu0 0
  %367 = vmatpush1.bf16.msra.mxu0 %v322
  %368 = vmatprep.subr.bf16.mxu0 0
  %369 = vmatpush1.bf16.msra.mxu0 %v323
  %370 = vmatprep.subr.bf16.mxu0 0
  %371 = vmatpush1.bf16.msra.mxu0 %v324
  %372 = vmatprep.subr.bf16.mxu0 0
  %373 = vmatpush1.bf16.msra.mxu0 %v325
  %374 = vmatprep.mubr.bf16.mxu0 %v183
  %375 = vmatmul.mubr.bf16.gmra.mrb[0].mxu0 %v182
  %v376 = vpop.f32.mrb[0].mxu0
  %v377 = vadd.f32 %v84, %v376
  %v378 = vpop.f32.mrb[0].mxu0
  %v379 = vpop.f32.mrb[0].mxu0
  %v380 = vadd.f32 %v84, %v379
  %v381 = vpop.f32.mrb[0].mxu0
  %382 = vmatprep.mubr.bf16.mxu0 %v185
  %383 = vmatmul.mubr.bf16.gmra.mrb[0].mxu0 %v184
  %v384 = vpop.f32.mrb[0].mxu0
  %v385 = vadd.f32 %v84, %v384
  %v386 = vpop.f32.mrb[0].mxu0
  %v387 = vpop.f32.mrb[0].mxu0
  %v388 = vadd.f32 %v84, %v387
  %v389 = vpop.f32.mrb[0].mxu0
  %390 = vmatprep.mubr.bf16.mxu0 %v187
  %391 = vmatmul.mubr.bf16.gmra.mrb[0].mxu0 %v186
  %v392 = vpop.f32.mrb[0].mxu0
  %v393 = vadd.f32 %v84, %v392
  %v394 = vpop.f32.mrb[0].mxu0
  %v395 = vpop.f32.mrb[0].mxu0
  %v396 = vadd.f32 %v84, %v395
  %v397 = vpop.f32.mrb[0].mxu0
  %398 = vmatprep.mubr.bf16.mxu0 %v189
  %399 = vmatmul.mubr.bf16.gmra.mrb[0].mxu0 %v188
  %v400 = vpop.f32.mrb[0].mxu0
  %v401 = vadd.f32 %v84, %v400
  %v402 = vpop.f32.mrb[0].mxu0
  %v403 = vpop.f32.mrb[0].mxu0
  %v404 = vadd.f32 %v84, %v403
  %v405 = vpop.f32.mrb[0].mxu0
  %406 = vmatprep.mubr.bf16.mxu0 %v191
  %407 = vmatmul.mubr.bf16.gmra.mrb[0].mxu0 %v190
  %v408 = vpop.f32.mrb[0].mxu0
  %v409 = vadd.f32 %v84, %v408
  %v410 = vpop.f32.mrb[0].mxu0
  %v411 = vpop.f32.mrb[0].mxu0
  %v412 = vadd.f32 %v84, %v411
  %v413 = vpop.f32.mrb[0].mxu0
  %414 = vmatprep.mubr.bf16.mxu0 %v193
  %415 = vmatmul.mubr.bf16.gmra.mrb[0].mxu0 %v192
  %v416 = vpop.f32.mrb[0].mxu0
  %v417 = vadd.f32 %v84, %v416
  %v418 = vpop.f32.mrb[0].mxu0
  %v419 = vpop.f32.mrb[0].mxu0
  %v420 = vadd.f32 %v84, %v419
  %v421 = vpop.f32.mrb[0].mxu0
  %422 = vmatprep.mubr.bf16.mxu0 %v195
  %423 = vmatmul.mubr.bf16.gmra.mrb[0].mxu0 %v194
  %v424 = vpop.f32.mrb[0].mxu0
  %v425 = vadd.f32 %v84, %v424
  %v426 = vpop.f32.mrb[0].mxu0
  %v427 = vpop.f32.mrb[0].mxu0
  %v428 = vadd.f32 %v84, %v427
  %v429 = vpop.f32.mrb[0].mxu0
  %430 = vmatprep.mubr.bf16.mxu0 %v197
  %431 = vmatmul.mubr.bf16.gmra.mrb[0].mxu0 %v196
  %v432 = vpop.f32.mrb[0].mxu0
  %v433 = vadd.f32 %v84, %v432
  %v434 = vpop.f32.mrb[0].mxu0
  %v435 = vpop.f32.mrb[0].mxu0
  %v436 = vadd.f32 %v84, %v435
  %v437 = vpop.f32.mrb[0].mxu0
  %438 = vmatprep.mubr.bf16.mxu0 %v199
  %439 = vmatmul.mubr.bf16.gmra.mrb[0].mxu0 %v198
  %v440 = vpop.f32.mrb[0].mxu0
  %v441 = vadd.f32 %v84, %v440
  %v442 = vpop.f32.mrb[0].mxu0
  %v443 = vpop.f32.mrb[0].mxu0
  %v444 = vadd.f32 %v84, %v443
  %v445 = vpop.f32.mrb[0].mxu0
  %446 = vmatprep.mubr.bf16.mxu0 %v201
  %447 = vmatmul.mubr.bf16.gmra.mrb[0].mxu0 %v200
  %v448 = vpop.f32.mrb[0].mxu0
  %v449 = vadd.f32 %v84, %v448
  %v450 = vpop.f32.mrb[0].mxu0
  %v451 = vpop.f32.mrb[0].mxu0
  %v452 = vadd.f32 %v84, %v451
  %v453 = vpop.f32.mrb[0].mxu0
  %454 = vmatprep.mubr.bf16.mxu0 %v203
  %455 = vmatmul.mubr.bf16.gmra.mrb[0].mxu0 %v202
  %v456 = vpop.f32.mrb[0].mxu0
  %v457 = vadd.f32 %v84, %v456
  %v458 = vpop.f32.mrb[0].mxu0
  %v459 = vpop.f32.mrb[0].mxu0
  %v460 = vadd.f32 %v84, %v459
  %v461 = vpop.f32.mrb[0].mxu0
  %462 = vmatprep.mubr.bf16.mxu0 %v205
  %463 = vmatmul.mubr.bf16.gmra.mrb[0].mxu0 %v204
  %v464 = vpop.f32.mrb[0].mxu0
  %v465 = vadd.f32 %v84, %v464
  %v466 = vpop.f32.mrb[0].mxu0
  %v467 = vpop.f32.mrb[0].mxu0
  %v468 = vadd.f32 %v84, %v467
  %v469 = vpop.f32.mrb[0].mxu0
  %470 = vmatprep.mubr.bf16.mxu0 %v207
  %471 = vmatmul.mubr.bf16.gmra.mrb[0].mxu0 %v206
  %v472 = vpop.f32.mrb[0].mxu0
  %v473 = vadd.f32 %v84, %v472
  %v474 = vpop.f32.mrb[0].mxu0
  %v475 = vpop.f32.mrb[0].mxu0
  %v476 = vadd.f32 %v84, %v475
  %v477 = vpop.f32.mrb[0].mxu0
  %478 = vmatprep.mubr.bf16.mxu0 %v209
  %479 = vmatmul.mubr.bf16.gmra.mrb[0].mxu0 %v208
  %v480 = vpop.f32.mrb[0].mxu0
  %v481 = vadd.f32 %v84, %v480
  %v482 = vpop.f32.mrb[0].mxu0
  %v483 = vpop.f32.mrb[0].mxu0
  %v484 = vadd.f32 %v84, %v483
  %v485 = vpop.f32.mrb[0].mxu0
  %486 = vmatprep.mubr.bf16.mxu0 %v211
  %487 = vmatmul.mubr.bf16.gmra.mrb[0].mxu0 %v210
  %v488 = vpop.f32.mrb[0].mxu0
  %v489 = vadd.f32 %v84, %v488
  %v490 = vpop.f32.mrb[0].mxu0
  %v491 = vpop.f32.mrb[0].mxu0
  %v492 = vadd.f32 %v84, %v491
  %v493 = vpop.f32.mrb[0].mxu0
  %494 = vmatprep.mubr.bf16.mxu0 %v213
  %495 = vmatmul.mubr.bf16.gmra.mrb[0].mxu0 %v212
  %v496 = vpop.f32.mrb[0].mxu0
  %v497 = vadd.f32 %v84, %v496
  %v498 = vpop.f32.mrb[0].mxu0
  %v499 = vpop.f32.mrb[0].mxu0
  %v500 = vadd.f32 %v84, %v499
  %v501 = vpop.f32.mrb[0].mxu0
  %502 = vdwg.mxu0
  %v503 = vmax.f32 %v377, 0.0
  %v504 = vmax.f32 %v380, 0.0
  %v505 = vmax.f32 %v385, 0.0
  %v506 = vmax.f32 %v388, 0.0
  %v507 = vmax.f32 %v393, 0.0
  %v508 = vmax.f32 %v396, 0.0
  %v509 = vmax.f32 %v401, 0.0
  %v510 = vmax.f32 %v404, 0.0
  %v511 = vmax.f32 %v409, 0.0
  %v512 = vmax.f32 %v412, 0.0
  %v513 = vmax.f32 %v417, 0.0
  %v514 = vmax.f32 %v420, 0.0
  %v515 = vmax.f32 %v425, 0.0
  %v516 = vmax.f32 %v428, 0.0
  %v517 = vmax.f32 %v433, 0.0
  %v518 = vmax.f32 %v436, 0.0
  %v519 = vmax.f32 %v441, 0.0
  %v520 = vmax.f32 %v444, 0.0
  %v521 = vmax.f32 %v449, 0.0
  %v522 = vmax.f32 %v452, 0.0
  %v523 = vmax.f32 %v457, 0.0
  %v524 = vmax.f32 %v460, 0.0
  %v525 = vmax.f32 %v465, 0.0
  %v526 = vmax.f32 %v468, 0.0
  %v527 = vmax.f32 %v473, 0.0
  %v528 = vmax.f32 %v476, 0.0
  %v529 = vmax.f32 %v481, 0.0
  %v530 = vmax.f32 %v484, 0.0
  %v531 = vmax.f32 %v489, 0.0
  %v532 = vmax.f32 %v492, 0.0
  %v533 = vmax.f32 %v497, 0.0
  %v534 = vmax.f32 %v500, 0.0
  %v535 = vpack.c.bf16 %v504, %v503
  %v536 = vpack.c.bf16 %v506, %v505
  %v537 = vpack.c.bf16 %v508, %v507
  %v538 = vpack.c.bf16 %v510, %v509
  %v539 = vpack.c.bf16 %v512, %v511
  %v540 = vpack.c.bf16 %v514, %v513
  %v541 = vpack.c.bf16 %v516, %v515
  %v542 = vpack.c.bf16 %v518, %v517
  %v543 = vpack.c.bf16 %v520, %v519
  %v544 = vpack.c.bf16 %v522, %v521
  %v545 = vpack.c.bf16 %v524, %v523
  %v546 = vpack.c.bf16 %v526, %v525
  %v547 = vpack.c.bf16 %v528, %v527
  %v548 = vpack.c.bf16 %v530, %v529
  %v549 = vpack.c.bf16 %v532, %v531
  %v550 = vpack.c.bf16 %v534, %v533
  %v567 = vunpack.c.l.b16 %v535
  %v568 = vunpack.c.h.b16 %v535
  %v569 = vunpack.c.l.b16 %v536
  %v570 = vunpack.c.h.b16 %v536
  %v571 = vunpack.c.l.b16 %v537
  %v572 = vunpack.c.h.b16 %v537
  %v573 = vunpack.c.l.b16 %v538
  %v574 = vunpack.c.h.b16 %v538
  %v575 = vunpack.c.l.b16 %v539
  %v576 = vunpack.c.h.b16 %v539
  %v577 = vunpack.c.l.b16 %v540
  %v578 = vunpack.c.h.b16 %v540
  %v579 = vunpack.c.l.b16 %v541
  %v580 = vunpack.c.h.b16 %v541
  %v581 = vunpack.c.l.b16 %v542
  %v582 = vunpack.c.h.b16 %v542
  %v583 = vunpack.c.l.b16 %v543
  %v584 = vunpack.c.h.b16 %v543
  %v585 = vunpack.c.l.b16 %v544
  %v586 = vunpack.c.h.b16 %v544
  %v587 = vunpack.c.l.b16 %v545
  %v588 = vunpack.c.h.b16 %v545
  %v589 = vunpack.c.l.b16 %v546
  %v590 = vunpack.c.h.b16 %v546
  %v591 = vunpack.c.l.b16 %v547
  %v592 = vunpack.c.h.b16 %v547
  %v593 = vunpack.c.l.b16 %v548
  %v594 = vunpack.c.h.b16 %v548
  %v595 = vunpack.c.l.b16 %v549
  %v596 = vunpack.c.h.b16 %v549
  %v597 = vunpack.c.l.b16 %v550
  %v598 = vunpack.c.h.b16 %v550
  %v599 = vpack.c.b16 %v567, %v567
  %v600 = vpack.c.b16 %v568, %v568
  %v601 = vpack.c.b16 %v569, %v569
  %v602 = vpack.c.b16 %v570, %v570
  %v603 = vpack.c.b16 %v571, %v571
  %v604 = vpack.c.b16 %v572, %v572
  %v605 = vpack.c.b16 %v573, %v573
  %v606 = vpack.c.b16 %v574, %v574
  %v607 = vpack.c.b16 %v575, %v575
  %v608 = vpack.c.b16 %v576, %v576
  %v609 = vpack.c.b16 %v577, %v577
  %v610 = vpack.c.b16 %v578, %v578
  %v611 = vpack.c.b16 %v579, %v579
  %v612 = vpack.c.b16 %v580, %v580
  %v613 = vpack.c.b16 %v581, %v581
  %v614 = vpack.c.b16 %v582, %v582
  %v615 = vpack.c.b16 %v583, %v583
  %v616 = vpack.c.b16 %v584, %v584
  %v617 = vpack.c.b16 %v585, %v585
  %v618 = vpack.c.b16 %v586, %v586
  %v619 = vpack.c.b16 %v587, %v587
  %v620 = vpack.c.b16 %v588, %v588
  %v621 = vpack.c.b16 %v589, %v589
  %v622 = vpack.c.b16 %v590, %v590
  %v623 = vpack.c.b16 %v591, %v591
  %v624 = vpack.c.b16 %v592, %v592
  %v625 = vpack.c.b16 %v593, %v593
  %v626 = vpack.c.b16 %v594, %v594
  %v627 = vpack.c.b16 %v595, %v595
  %v628 = vpack.c.b16 %v596, %v596
  %v629 = vpack.c.b16 %v597, %v597
  %v630 = vpack.c.b16 %v598, %v598
  %663 = vst [vmem:[%s3] sm:$0xf] %v599
  %664 = vst [vmem:[%s3 + $0x4] sm:$0xf] %v600
  %665 = vst [vmem:[%s3 + $0x8] sm:$0xf] %v601
  %666 = vst [vmem:[%s3 + $0xc] sm:$0xf] %v602
  %667 = vst [vmem:[%s3 + $0x10] sm:$0xf] %v603
  %668 = vst [vmem:[%s3 + $0x14] sm:$0xf] %v604
  %669 = vst [vmem:[%s3 + $0x18] sm:$0xf] %v605
  %670 = vst [vmem:[%s3 + $0x1c] sm:$0xf] %v606
  %671 = vst [vmem:[%s3 + $0x20] sm:$0xf] %v607
  %672 = vst [vmem:[%s3 + $0x24] sm:$0xf] %v608
  %673 = vst [vmem:[%s3 + $0x28] sm:$0xf] %v609
  %674 = vst [vmem:[%s3 + $0x2c] sm:$0xf] %v610
  %675 = vst [vmem:[%s3 + $0x30] sm:$0xf] %v611
  %676 = vst [vmem:[%s3 + $0x34] sm:$0xf] %v612
  %677 = vst [vmem:[%s3 + $0x38] sm:$0xf] %v613
  %678 = vst [vmem:[%s3 + $0x3c] sm:$0xf] %v614
  %679 = vst [vmem:[%s3 + $0x40] sm:$0xf] %v615
  %680 = vst [vmem:[%s3 + $0x44] sm:$0xf] %v616
  %681 = vst [vmem:[%s3 + $0x48] sm:$0xf] %v617
  %682 = vst [vmem:[%s3 + $0x4c] sm:$0xf] %v618
  %683 = vst [vmem:[%s3 + $0x50] sm:$0xf] %v619
  %684 = vst [vmem:[%s3 + $0x54] sm:$0xf] %v620
  %685 = vst [vmem:[%s3 + $0x58] sm:$0xf] %v621
  %686 = vst [vmem:[%s3 + $0x5c] sm:$0xf] %v622
  %687 = vst [vmem:[%s3 + $0x60] sm:$0xf] %v623
  %688 = vst [vmem:[%s3 + $0x64] sm:$0xf] %v624
  %689 = vst [vmem:[%s3 + $0x68] sm:$0xf] %v625
  %690 = vst [vmem:[%s3 + $0x6c] sm:$0xf] %v626
  %691 = vst [vmem:[%s3 + $0x70] sm:$0xf] %v627
  %692 = vst [vmem:[%s3 + $0x74] sm:$0xf] %v628
  %693 = vst [vmem:[%s3 + $0x78] sm:$0xf] %v629
  %694 = vst [vmem:[%s3 + $0x7c] sm:$0xf] %v630
  // Predicated region
  $region14: #{mask_detector_forward.2} parent=0 // pred_check
    _
  $region15: #{mask_detector_forward.2} parent=0 // pred_check_branch
    %696 = sbr.rel (0) target = $region17
  $region16: #{mask_detector_forward.2} parent=0 // pred_region
    _
  $region17: #{mask_detector_forward.2} parent=0 // pred_fallthru
    _
  // Predicated region
  $region18: #{mask_detector_forward.2} parent=0 // pred_check
    _
  $region19: #{mask_detector_forward.2} parent=0 // pred_check_branch
    %698 = sbr.rel (0) target = $region21
  $region20: #{mask_detector_forward.2} parent=0 // pred_region
    _
  $region21: #{mask_detector_forward.2} parent=0 // pred_fallthru
    _

// kernel: mask_detector_forward.3
$region0: #{mask_detector_forward.3}
  #allocation0 [shape = 'u32[]', space=smem, size = 0x4, offset = 0x4, fixed_abs, tag = 'smem constant byte address 0x4 - core index']
  #allocation1 [shape = 'u32[144,128]{1,0:T(1,128)}', space=vmem, size = 0x12000, scoped, tag = 'internal scratch']
  %s0 = inlined_call_operand.vmem [shape: bf16[2,64,128], index: 0, kind: input, shape index: {}]
  %s1 = inlined_call_operand.vmem [shape: bf16[128,1024], index: 1, kind: input, shape index: {}]
  %s2 = inlined_call_operand.vmem [shape: f32[1,1024], index: 2, kind: input, shape index: {}]
  %s3 = inlined_call_operand.vmem [shape: bf16[1024,128], index: 3, kind: input, shape index: {}]
  %s4 = inlined_call_operand.vmem [shape: f32[1,128], index: 4, kind: input, shape index: {}]
  %s5 = inlined_call_operand.vmem [shape: f32[2,128], index: 5, kind: output, shape index: {}]
  %s6 = sld [smem:[#allocation0]]
  $region30: #{mask_detector_forward.3} parent=0
    _
  %s8 = ssub.s32 1, %s6
  %s9 = scalar_select 0, %s8, %s6
  // Predicated region
  $region2: #{mask_detector_forward.3} parent=0 // pred_check
    _
  $region3: #{mask_detector_forward.3} parent=0 // pred_check_branch
    %11 = sbr.rel (0) target = $region5
  $region4: #{mask_detector_forward.3} parent=0 // pred_region
    _
  $region5: #{mask_detector_forward.3} parent=0 // pred_fallthru
    _
  // Predicated region
  $region6: #{mask_detector_forward.3} parent=0 // pred_check
    _
  $region7: #{mask_detector_forward.3} parent=0 // pred_check_branch
    %13 = sbr.rel (0) target = $region9
  $region8: #{mask_detector_forward.3} parent=0 // pred_region
    _
  $region9: #{mask_detector_forward.3} parent=0 // pred_fallthru
    _
  // Predicated region
  $region10: #{mask_detector_forward.3} parent=0 // pred_check
    _
  $region11: #{mask_detector_forward.3} parent=0 // pred_check_branch
    %15 = sbr.rel (0) target = $region13
  $region12: #{mask_detector_forward.3} parent=0 // pred_region
    _
  $region13: #{mask_detector_forward.3} parent=0 // pred_fallthru
    _
  // Predicated region
  $region14: #{mask_detector_forward.3} parent=0 // pred_check
    _
  $region15: #{mask_detector_forward.3} parent=0 // pred_check_branch
    %17 = sbr.rel (0) target = $region17
  $region16: #{mask_detector_forward.3} parent=0 // pred_region
    _
  $region17: #{mask_detector_forward.3} parent=0 // pred_fallthru
    _
  // Predicated region
  $region18: #{mask_detector_forward.3} parent=0 // pred_check
    _
  $region19: #{mask_detector_forward.3} parent=0 // pred_check_branch
    %19 = sbr.rel (0) target = $region21
  $region20: #{mask_detector_forward.3} parent=0 // pred_region
    _
  $region21: #{mask_detector_forward.3} parent=0 // pred_fallthru
    _
  %v21 = vld [vmem:[%s0] sm:$0xf]
  %v22 = vld [vmem:[%s0 + $0x4] sm:$0xf]
  %v23 = vld [vmem:[%s0 + $0x8] sm:$0xf]
  %v24 = vld [vmem:[%s0 + $0xc] sm:$0xf]
  %v25 = vld [vmem:[%s0 + $0x10] sm:$0xf]
  %v26 = vld [vmem:[%s0 + $0x14] sm:$0xf]
  %v27 = vld [vmem:[%s0 + $0x18] sm:$0xf]
  %v28 = vld [vmem:[%s0 + $0x1c] sm:$0xf]
  %v29 = vld [vmem:[%s0 + $0x20] sm:$0xf]
  %v30 = vld [vmem:[%s0 + $0x24] sm:$0xf]
  %v31 = vld [vmem:[%s0 + $0x28] sm:$0xf]
  %v32 = vld [vmem:[%s0 + $0x2c] sm:$0xf]
  %v33 = vld [vmem:[%s0 + $0x30] sm:$0xf]
  %v34 = vld [vmem:[%s0 + $0x34] sm:$0xf]
  %v35 = vld [vmem:[%s0 + $0x38] sm:$0xf]
  %v36 = vld [vmem:[%s0 + $0x3c] sm:$0xf]
  %v37 = vunpack.c.l.bf16 %v21
  %v38 = vunpack.c.l.bf16 %v22
  %v39 = vunpack.c.l.bf16 %v23
  %v40 = vunpack.c.l.bf16 %v24
  %v41 = vunpack.c.l.bf16 %v25
  %v42 = vunpack.c.l.bf16 %v26
  %v43 = vunpack.c.l.bf16 %v27
  %v44 = vunpack.c.l.bf16 %v28
  %v45 = vunpack.c.l.bf16 %v29
  %v46 = vunpack.c.l.bf16 %v30
  %v47 = vunpack.c.l.bf16 %v31
  %v48 = vunpack.c.l.bf16 %v32
  %v49 = vunpack.c.l.bf16 %v33
  %v50 = vunpack.c.l.bf16 %v34
  %v51 = vunpack.c.l.bf16 %v35
  %v52 = vunpack.c.l.bf16 %v36
  %v53 = vadd.f32 %v37, %v38
  %v54 = vadd.f32 %v53, %v39
  %v55 = vadd.f32 %v54, %v40
  %v56 = vadd.f32 %v55, %v41
  %v57 = vadd.f32 %v56, %v42
  %v58 = vadd.f32 %v57, %v43
  %v59 = vadd.f32 %v58, %v44
  %v60 = vrot.slane %v59, 4
  %v61 = vadd.f32 %v59, %v60
  %v62 = vrot.slane %v61, 2
  %v63 = vadd.f32 %v61, %v62
  %v64 = vrot.slane %v63, 1
  %v65 = vadd.f32 %v63, %v64
  %v66 = vadd.f32 %v45, %v46
  %v67 = vadd.f32 %v66, %v47
  %v68 = vadd.f32 %v67, %v48
  %v69 = vadd.f32 %v68, %v49
  %v70 = vadd.f32 %v69, %v50
  %v71 = vadd.f32 %v70, %v51
  %v72 = vadd.f32 %v71, %v52
  %v73 = vrot.slane %v72, 4
  %v74 = vadd.f32 %v72, %v73
  %v75 = vrot.slane %v74, 2
  %v76 = vadd.f32 %v74, %v75
  %v77 = vrot.slane %v76, 1
  %v78 = vadd.f32 %v76, %v77
  %v79 = vrcp.pop 64.0
  %v80 = vmul.f32 %v65, %v79
  %v81 = vmul.f32 %v78, %v79
  %v82 = vpack.c.bf16 %v80, %v80
  %v83 = vpack.c.bf16 %v81, %v81
  %v84 = vld [vmem:[%s1] sm:$0xff]
  %v85 = vld [vmem:[%s1 + $0x8] sm:$0xff]
  %v86 = vld [vmem:[%s1 + $0x10] sm:$0xff]
  %v87 = vld [vmem:[%s1 + $0x18] sm:$0xff]
  %v88 = vld [vmem:[%s1 + $0x20] sm:$0xff]
  %v89 = vld [vmem:[%s1 + $0x28] sm:$0xff]
  %v90 = vld [vmem:[%s1 + $0x30] sm:$0xff]
  %v91 = vld [vmem:[%s1 + $0x38] sm:$0xff]
  %v92 = vld [vmem:[%s1 + $0x40] sm:$0xff]
  %v93 = vld [vmem:[%s1 + $0x48] sm:$0xff]
  %v94 = vld [vmem:[%s1 + $0x50] sm:$0xff]
  %v95 = vld [vmem:[%s1 + $0x58] sm:$0xff]
  %v96 = vld [vmem:[%s1 + $0x60] sm:$0xff]
  %v97 = vld [vmem:[%s1 + $0x68] sm:$0xff]
  %v98 = vld [vmem:[%s1 + $0x70] sm:$0xff]
  %v99 = vld [vmem:[%s1 + $0x78] sm:$0xff]
  %v100 = vld [vmem:[%s1 + $0x80] sm:$0xff]
  %v101 = vld [vmem:[%s1 + $0x88] sm:$0xff]
  %v102 = vld [vmem:[%s1 + $0x90] sm:$0xff]
  %v103 = vld [vmem:[%s1 + $0x98] sm:$0xff]
  %v104 = vld [vmem:[%s1 + $0xa0] sm:$0xff]
  %v105 = vld [vmem:[%s1 + $0xa8] sm:$0xff]
  %v106 = vld [vmem:[%s1 + $0xb0] sm:$0xff]
  %v107 = vld [vmem:[%s1 + $0xb8] sm:$0xff]
  %v108 = vld [vmem:[%s1 + $0xc0] sm:$0xff]
  %v109 = vld [vmem:[%s1 + $0xc8] sm:$0xff]
  %v110 = vld [vmem:[%s1 + $0xd0] sm:$0xff]
  %v111 = vld [vmem:[%s1 + $0xd8] sm:$0xff]
  %v112 = vld [vmem:[%s1 + $0xe0] sm:$0xff]
  %v113 = vld [vmem:[%s1 + $0xe8] sm:$0xff]
  %v114 = vld [vmem:[%s1 + $0xf0] sm:$0xff]
  %v115 = vld [vmem:[%s1 + $0xf8] sm:$0xff]
  %v116 = vld [vmem:[%s1 + $0x100] sm:$0xff]
  %v117 = vld [vmem:[%s1 + $0x108] sm:$0xff]
  %v118 = vld [vmem:[%s1 + $0x110] sm:$0xff]
  %v119 = vld [vmem:[%s1 + $0x118] sm:$0xff]
  %v120 = vld [vmem:[%s1 + $0x120] sm:$0xff]
  %v121 = vld [vmem:[%s1 + $0x128] sm:$0xff]
  %v122 = vld [vmem:[%s1 + $0x130] sm:$0xff]
  %v123 = vld [vmem:[%s1 + $0x138] sm:$0xff]
  %v124 = vld [vmem:[%s1 + $0x140] sm:$0xff]
  %v125 = vld [vmem:[%s1 + $0x148] sm:$0xff]
  %v126 = vld [vmem:[%s1 + $0x150] sm:$0xff]
  %v127 = vld [vmem:[%s1 + $0x158] sm:$0xff]
  %v128 = vld [vmem:[%s1 + $0x160] sm:$0xff]
  %v129 = vld [vmem:[%s1 + $0x168] sm:$0xff]
  %v130 = vld [vmem:[%s1 + $0x170] sm:$0xff]
  %v131 = vld [vmem:[%s1 + $0x178] sm:$0xff]
  %v132 = vld [vmem:[%s1 + $0x180] sm:$0xff]
  %v133 = vld [vmem:[%s1 + $0x188] sm:$0xff]
  %v134 = vld [vmem:[%s1 + $0x190] sm:$0xff]
  %v135 = vld [vmem:[%s1 + $0x198] sm:$0xff]
  %v136 = vld [vmem:[%s1 + $0x1a0] sm:$0xff]
  %v137 = vld [vmem:[%s1 + $0x1a8] sm:$0xff]
  %v138 = vld [vmem:[%s1 + $0x1b0] sm:$0xff]
  %v139 = vld [vmem:[%s1 + $0x1b8] sm:$0xff]
  %v140 = vld [vmem:[%s1 + $0x1c0] sm:$0xff]
  %v141 = vld [vmem:[%s1 + $0x1c8] sm:$0xff]
  %v142 = vld [vmem:[%s1 + $0x1d0] sm:$0xff]
  %v143 = vld [vmem:[%s1 + $0x1d8] sm:$0xff]
  %v144 = vld [vmem:[%s1 + $0x1e0] sm:$0xff]
  %v145 = vld [vmem:[%s1 + $0x1e8] sm:$0xff]
  %v146 = vld [vmem:[%s1 + $0x1f0] sm:$0xff]
  %v147 = vld [vmem:[%s1 + $0x1f8] sm:$0xff]
  %v148 = vld [vmem:[%s2] sm:$0xff]
  %v150 = vlaneseq
  %v151 = vshrl.u32 %v150, 7
  %v152 = vsub.s32 0, %v151
  %v153 = vrot.slane %v148, %v152
  %v154 = vlaneseq
  %v155 = vshrl.u32 %v154, 7
  %v156 = vsub.s32 1, %v155
  %v157 = vrot.slane %v148, %v156
  %v158 = vlaneseq
  %v159 = vshrl.u32 %v158, 7
  %v160 = vsub.s32 2, %v159
  %v161 = vrot.slane %v148, %v160
  %v162 = vlaneseq
  %v163 = vshrl.u32 %v162, 7
  %v164 = vsub.s32 3, %v163
  %v165 = vrot.slane %v148, %v164
  %v166 = vlaneseq
  %v167 = vshrl.u32 %v166, 7
  %v168 = vsub.s32 4, %v167
  %v169 = vrot.slane %v148, %v168
  %v170 = vlaneseq
  %v171 = vshrl.u32 %v170, 7
  %v172 = vsub.s32 5, %v171
  %v173 = vrot.slane %v148, %v172
  %v174 = vlaneseq
  %v175 = vshrl.u32 %v174, 7
  %v176 = vsub.s32 6, %v175
  %v177 = vrot.slane %v148, %v176
  %v178 = vlaneseq
  %v179 = vshrl.u32 %v178, 7
  %v180 = vsub.s32 7, %v179
  %v181 = vrot.slane %v148, %v180
  %v192 = vunpack.c.l.b16 %v82
  %v193 = vunpack.c.l.b16 %v83
  %vm194 = vcmask 1041409
  %v195 = vsel %vm194, %v193, %v192
  %v196 = vpack.c.b16 %v195, %v195
  %v262 = vunpack.c.l.b16 %v84
  %v263 = vunpack.c.h.b16 %v84
  %v264 = vunpack.c.l.b16 %v85
  %v265 = vunpack.c.h.b16 %v85
  %v266 = vunpack.c.l.b16 %v86
  %v267 = vunpack.c.h.b16 %v86
  %v268 = vunpack.c.l.b16 %v87
  %v269 = vunpack.c.h.b16 %v87
  %v270 = vunpack.c.l.b16 %v88
  %v271 = vunpack.c.h.b16 %v88
  %v272 = vunpack.c.l.b16 %v89
  %v273 = vunpack.c.h.b16 %v89
  %v274 = vunpack.c.l.b16 %v90
  %v275 = vunpack.c.h.b16 %v90
  %v276 = vunpack.c.l.b16 %v91
  %v277 = vunpack.c.h.b16 %v91
  %v278 = vunpack.c.l.b16 %v92
  %v279 = vunpack.c.h.b16 %v92
  %v280 = vunpack.c.l.b16 %v93
  %v281 = vunpack.c.h.b16 %v93
  %v282 = vunpack.c.l.b16 %v94
  %v283 = vunpack.c.h.b16 %v94
  %v284 = vunpack.c.l.b16 %v95
  %v285 = vunpack.c.h.b16 %v95
  %v286 = vunpack.c.l.b16 %v96
  %v287 = vunpack.c.h.b16 %v96
  %v288 = vunpack.c.l.b16 %v97
  %v289 = vunpack.c.h.b16 %v97
  %v290 = vunpack.c.l.b16 %v98
  %v291 = vunpack.c.h.b16 %v98
  %v292 = vunpack.c.l.b16 %v99
  %v293 = vunpack.c.h.b16 %v99
  %v294 = vunpack.c.l.b16 %v100
  %v295 = vunpack.c.h.b16 %v100
  %v296 = vunpack.c.l.b16 %v101
  %v297 = vunpack.c.h.b16 %v101
  %v298 = vunpack.c.l.b16 %v102
  %v299 = vunpack.c.h.b16 %v102
  %v300 = vunpack.c.l.b16 %v103
  %v301 = vunpack.c.h.b16 %v103
  %v302 = vunpack.c.l.b16 %v104
  %v303 = vunpack.c.h.b16 %v104
  %v304 = vunpack.c.l.b16 %v105
  %v305 = vunpack.c.h.b16 %v105
  %v306 = vunpack.c.l.b16 %v106
  %v307 = vunpack.c.h.b16 %v106
  %v308 = vunpack.c.l.b16 %v107
  %v309 = vunpack.c.h.b16 %v107
  %v310 = vunpack.c.l.b16 %v108
  %v311 = vunpack.c.h.b16 %v108
  %v312 = vunpack.c.l.b16 %v109
  %v313 = vunpack.c.h.b16 %v109
  %v314 = vunpack.c.l.b16 %v110
  %v315 = vunpack.c.h.b16 %v110
  %v316 = vunpack.c.l.b16 %v111
  %v317 = vunpack.c.h.b16 %v111
  %v318 = vunpack.c.l.b16 %v112
  %v319 = vunpack.c.h.b16 %v112
  %v320 = vunpack.c.l.b16 %v113
  %v321 = vunpack.c.h.b16 %v113
  %v322 = vunpack.c.l.b16 %v114
  %v323 = vunpack.c.h.b16 %v114
  %v324 = vunpack.c.l.b16 %v115
  %v325 = vunpack.c.h.b16 %v115
  %v326 = vunpack.c.l.b16 %v116
  %v327 = vunpack.c.h.b16 %v116
  %v328 = vunpack.c.l.b16 %v117
  %v329 = vunpack.c.h.b16 %v117
  %v330 = vunpack.c.l.b16 %v118
  %v331 = vunpack.c.h.b16 %v118
  %v332 = vunpack.c.l.b16 %v119
  %v333 = vunpack.c.h.b16 %v119
  %v334 = vunpack.c.l.b16 %v120
  %v335 = vunpack.c.h.b16 %v120
  %v336 = vunpack.c.l.b16 %v121
  %v337 = vunpack.c.h.b16 %v121
  %v338 = vunpack.c.l.b16 %v122
  %v339 = vunpack.c.h.b16 %v122
  %v340 = vunpack.c.l.b16 %v123
  %v341 = vunpack.c.h.b16 %v123
  %v342 = vunpack.c.l.b16 %v124
  %v343 = vunpack.c.h.b16 %v124
  %v344 = vunpack.c.l.b16 %v125
  %v345 = vunpack.c.h.b16 %v125
  %v346 = vunpack.c.l.b16 %v126
  %v347 = vunpack.c.h.b16 %v126
  %v348 = vunpack.c.l.b16 %v127
  %v349 = vunpack.c.h.b16 %v127
  %v350 = vunpack.c.l.b16 %v128
  %v351 = vunpack.c.h.b16 %v128
  %v352 = vunpack.c.l.b16 %v129
  %v353 = vunpack.c.h.b16 %v129
  %v354 = vunpack.c.l.b16 %v130
  %v355 = vunpack.c.h.b16 %v130
  %v356 = vunpack.c.l.b16 %v131
  %v357 = vunpack.c.h.b16 %v131
  %v358 = vunpack.c.l.b16 %v132
  %v359 = vunpack.c.h.b16 %v132
  %v360 = vunpack.c.l.b16 %v133
  %v361 = vunpack.c.h.b16 %v133
  %v362 = vunpack.c.l.b16 %v134
  %v363 = vunpack.c.h.b16 %v134
  %v364 = vunpack.c.l.b16 %v135
  %v365 = vunpack.c.h.b16 %v135
  %v366 = vunpack.c.l.b16 %v136
  %v367 = vunpack.c.h.b16 %v136
  %v368 = vunpack.c.l.b16 %v137
  %v369 = vunpack.c.h.b16 %v137
  %v370 = vunpack.c.l.b16 %v138
  %v371 = vunpack.c.h.b16 %v138
  %v372 = vunpack.c.l.b16 %v139
  %v373 = vunpack.c.h.b16 %v139
  %v374 = vunpack.c.l.b16 %v140
  %v375 = vunpack.c.h.b16 %v140
  %v376 = vunpack.c.l.b16 %v141
  %v377 = vunpack.c.h.b16 %v141
  %v378 = vunpack.c.l.b16 %v142
  %v379 = vunpack.c.h.b16 %v142
  %v380 = vunpack.c.l.b16 %v143
  %v381 = vunpack.c.h.b16 %v143
  %v382 = vunpack.c.l.b16 %v144
  %v383 = vunpack.c.h.b16 %v144
  %v384 = vunpack.c.l.b16 %v145
  %v385 = vunpack.c.h.b16 %v145
  %v386 = vunpack.c.l.b16 %v146
  %v387 = vunpack.c.h.b16 %v146
  %v388 = vunpack.c.l.b16 %v147
  %v389 = vunpack.c.h.b16 %v147
  %v390 = vpack.c.b16 %v270, %v262
  %v391 = vpack.c.b16 %v271, %v263
  %v392 = vpack.c.b16 %v272, %v264
  %v393 = vpack.c.b16 %v273, %v265
  %v394 = vpack.c.b16 %v274, %v266
  %v395 = vpack.c.b16 %v275, %v267
  %v396 = vpack.c.b16 %v276, %v268
  %v397 = vpack.c.b16 %v277, %v269
  %v398 = vpack.c.b16 %v286, %v278
  %v399 = vpack.c.b16 %v287, %v279
  %v400 = vpack.c.b16 %v288, %v280
  %v401 = vpack.c.b16 %v289, %v281
  %v402 = vpack.c.b16 %v290, %v282
  %v403 = vpack.c.b16 %v291, %v283
  %v404 = vpack.c.b16 %v292, %v284
  %v405 = vpack.c.b16 %v293, %v285
  %v406 = vpack.c.b16 %v302, %v294
  %v407 = vpack.c.b16 %v303, %v295
  %v408 = vpack.c.b16 %v304, %v296
  %v409 = vpack.c.b16 %v305, %v297
  %v410 = vpack.c.b16 %v306, %v298
  %v411 = vpack.c.b16 %v307, %v299
  %v412 = vpack.c.b16 %v308, %v300
  %v413 = vpack.c.b16 %v309, %v301
  %v414 = vpack.c.b16 %v318, %v310
  %v415 = vpack.c.b16 %v319, %v311
  %v416 = vpack.c.b16 %v320, %v312
  %v417 = vpack.c.b16 %v321, %v313
  %v418 = vpack.c.b16 %v322, %v314
  %v419 = vpack.c.b16 %v323, %v315
  %v420 = vpack.c.b16 %v324, %v316
  %v421 = vpack.c.b16 %v325, %v317
  %v422 = vpack.c.b16 %v334, %v326
  %v423 = vpack.c.b16 %v335, %v327
  %v424 = vpack.c.b16 %v336, %v328
  %v425 = vpack.c.b16 %v337, %v329
  %v426 = vpack.c.b16 %v338, %v330
  %v427 = vpack.c.b16 %v339, %v331
  %v428 = vpack.c.b16 %v340, %v332
  %v429 = vpack.c.b16 %v341, %v333
  %v430 = vpack.c.b16 %v350, %v342
  %v431 = vpack.c.b16 %v351, %v343
  %v432 = vpack.c.b16 %v352, %v344
  %v433 = vpack.c.b16 %v353, %v345
  %v434 = vpack.c.b16 %v354, %v346
  %v435 = vpack.c.b16 %v355, %v347
  %v436 = vpack.c.b16 %v356, %v348
  %v437 = vpack.c.b16 %v357, %v349
  %v438 = vpack.c.b16 %v366, %v358
  %v439 = vpack.c.b16 %v367, %v359
  %v440 = vpack.c.b16 %v368, %v360
  %v441 = vpack.c.b16 %v369, %v361
  %v442 = vpack.c.b16 %v370, %v362
  %v443 = vpack.c.b16 %v371, %v363
  %v444 = vpack.c.b16 %v372, %v364
  %v445 = vpack.c.b16 %v373, %v365
  %v446 = vpack.c.b16 %v382, %v374
  %v447 = vpack.c.b16 %v383, %v375
  %v448 = vpack.c.b16 %v384, %v376
  %v449 = vpack.c.b16 %v385, %v377
  %v450 = vpack.c.b16 %v386, %v378
  %v451 = vpack.c.b16 %v387, %v379
  %v452 = vpack.c.b16 %v388, %v380
  %v453 = vpack.c.b16 %v389, %v381
  %518 = vmatprep.subr.bf16.mxu0 %v391
  %519 = vmatpush1.bf16.msra.mxu0 %v390
  %520 = vmatprep.subr.bf16.mxu0 %v399
  %521 = vmatpush1.bf16.msra.mxu0 %v398
  %522 = vmatprep.subr.bf16.mxu0 %v407
  %523 = vmatpush1.bf16.msra.mxu0 %v406
  %524 = vmatprep.subr.bf16.mxu0 %v415
  %525 = vmatpush1.bf16.msra.mxu0 %v414
  %526 = vmatprep.subr.bf16.mxu0 %v423
  %527 = vmatpush1.bf16.msra.mxu0 %v422
  %528 = vmatprep.subr.bf16.mxu0 %v431
  %529 = vmatpush1.bf16.msra.mxu0 %v430
  %530 = vmatprep.subr.bf16.mxu0 %v439
  %531 = vmatpush1.bf16.msra.mxu0 %v438
  %532 = vmatprep.subr.bf16.mxu0 %v447
  %533 = vmatpush1.bf16.msra.mxu0 %v446
  %534 = vmatprep.subr.bf16.mxu0 0
  %535 = vmatpush1.bf16.msra.mxu0 0
  %536 = vmatprep.subr.bf16.mxu0 0
  %537 = vmatpush1.bf16.msra.mxu0 0
  %538 = vmatprep.subr.bf16.mxu0 0
  %539 = vmatpush1.bf16.msra.mxu0 0
  %540 = vmatprep.subr.bf16.mxu0 0
  %541 = vmatpush1.bf16.msra.mxu0 0
  %542 = vmatprep.subr.bf16.mxu0 0
  %543 = vmatpush1.bf16.msra.mxu0 0
  %544 = vmatprep.subr.bf16.mxu0 0
  %545 = vmatpush1.bf16.msra.mxu0 0
  %546 = vmatprep.subr.bf16.mxu0 0
  %547 = vmatpush1.bf16.msra.mxu0 0
  %548 = vmatprep.subr.bf16.mxu0 0
  %549 = vmatpush1.bf16.msra.mxu0 0
  %550 = vmatprep.mubr.bf16.mxu0 0
  %551 = vmatmul.mubr.bf16.gmra.mrb[0].mxu0 %v196
  %v552 = vpop.f32.mrb[0].mxu0
  %v553 = vadd.f32 %v153, %v552
  %v554 = vpop.f32.mrb[0].mxu0
  %v555 = vadd.f32 %v157, %v554
  %v556 = vpop.f32.mrb[0].mxu0
  %v557 = vpop.f32.mrb[0].mxu0
  %558 = vdwg.mxu0
  %559 = vmatprep.subr.bf16.mxu0 %v393
  %560 = vmatpush1.bf16.msra.mxu0 %v392
  %561 = vmatprep.subr.bf16.mxu0 %v401
  %562 = vmatpush1.bf16.msra.mxu0 %v400
  %563 = vmatprep.subr.bf16.mxu0 %v409
  %564 = vmatpush1.bf16.msra.mxu0 %v408
  %565 = vmatprep.subr.bf16.mxu0 %v417
  %566 = vmatpush1.bf16.msra.mxu0 %v416
  %567 = vmatprep.subr.bf16.mxu0 %v425
  %568 = vmatpush1.bf16.msra.mxu0 %v424
  %569 = vmatprep.subr.bf16.mxu0 %v433
  %570 = vmatpush1.bf16.msra.mxu0 %v432
  %571 = vmatprep.subr.bf16.mxu0 %v441
  %572 = vmatpush1.bf16.msra.mxu0 %v440
  %573 = vmatprep.subr.bf16.mxu0 %v449
  %574 = vmatpush1.bf16.msra.mxu0 %v448
  %575 = vmatprep.subr.bf16.mxu0 0
  %576 = vmatpush1.bf16.msra.mxu0 0
  %577 = vmatprep.subr.bf16.mxu0 0
  %578 = vmatpush1.bf16.msra.mxu0 0
  %579 = vmatprep.subr.bf16.mxu0 0
  %580 = vmatpush1.bf16.msra.mxu0 0
  %581 = vmatprep.subr.bf16.mxu0 0
  %582 = vmatpush1.bf16.msra.mxu0 0
  %583 = vmatprep.subr.bf16.mxu0 0
  %584 = vmatpush1.bf16.msra.mxu0 0
  %585 = vmatprep.subr.bf16.mxu0 0
  %586 = vmatpush1.bf16.msra.mxu0 0
  %587 = vmatprep.subr.bf16.mxu0 0
  %588 = vmatpush1.bf16.msra.mxu0 0
  %589 = vmatprep.subr.bf16.mxu0 0
  %590 = vmatpush1.bf16.msra.mxu0 0
  %591 = vmatprep.mubr.bf16.mxu0 0
  %592 = vmatmul.mubr.bf16.gmra.mrb[0].mxu0 %v196
  %v593 = vpop.f32.mrb[0].mxu0
  %v594 = vadd.f32 %v161, %v593
  %v595 = vpop.f32.mrb[0].mxu0
  %v596 = vadd.f32 %v165, %v595
  %v597 = vpop.f32.mrb[0].mxu0
  %v598 = vpop.f32.mrb[0].mxu0
  %599 = vdwg.mxu0
  %600 = vmatprep.subr.bf16.mxu0 %v395
  %601 = vmatpush1.bf16.msra.mxu0 %v394
  %602 = vmatprep.subr.bf16.mxu0 %v403
  %603 = vmatpush1.bf16.msra.mxu0 %v402
  %604 = vmatprep.subr.bf16.mxu0 %v411
  %605 = vmatpush1.bf16.msra.mxu0 %v410
  %606 = vmatprep.subr.bf16.mxu0 %v419
  %607 = vmatpush1.bf16.msra.mxu0 %v418
  %608 = vmatprep.subr.bf16.mxu0 %v427
  %609 = vmatpush1.bf16.msra.mxu0 %v426
  %610 = vmatprep.subr.bf16.mxu0 %v435
  %611 = vmatpush1.bf16.msra.mxu0 %v434
  %612 = vmatprep.subr.bf16.mxu0 %v443
  %613 = vmatpush1.bf16.msra.mxu0 %v442
  %614 = vmatprep.subr.bf16.mxu0 %v451
  %615 = vmatpush1.bf16.msra.mxu0 %v450
  %616 = vmatprep.subr.bf16.mxu0 0
  %617 = vmatpush1.bf16.msra.mxu0 0
  %618 = vmatprep.subr.bf16.mxu0 0
  %619 = vmatpush1.bf16.msra.mxu0 0
  %620 = vmatprep.subr.bf16.mxu0 0
  %621 = vmatpush1.bf16.msra.mxu0 0
  %622 = vmatprep.subr.bf16.mxu0 0
  %623 = vmatpush1.bf16.msra.mxu0 0
  %624 = vmatprep.subr.bf16.mxu0 0
  %625 = vmatpush1.bf16.msra.mxu0 0
  %626 = vmatprep.subr.bf16.mxu0 0
  %627 = vmatpush1.bf16.msra.mxu0 0
  %628 = vmatprep.subr.bf16.mxu0 0
  %629 = vmatpush1.bf16.msra.mxu0 0
  %630 = vmatprep.subr.bf16.mxu0 0
  %631 = vmatpush1.bf16.msra.mxu0 0
  %632 = vmatprep.mubr.bf16.mxu0 0
  %633 = vmatmul.mubr.bf16.gmra.mrb[0].mxu0 %v196
  %v634 = vpop.f32.mrb[0].mxu0
  %v635 = vadd.f32 %v169, %v634
  %v636 = vpop.f32.mrb[0].mxu0
  %v637 = vadd.f32 %v173, %v636
  %v638 = vpop.f32.mrb[0].mxu0
  %v639 = vpop.f32.mrb[0].mxu0
  %640 = vdwg.mxu0
  %641 = vmatprep.subr.bf16.mxu0 %v397
  %642 = vmatpush1.bf16.msra.mxu0 %v396
  %643 = vmatprep.subr.bf16.mxu0 %v405
  %644 = vmatpush1.bf16.msra.mxu0 %v404
  %645 = vmatprep.subr.bf16.mxu0 %v413
  %646 = vmatpush1.bf16.msra.mxu0 %v412
  %647 = vmatprep.subr.bf16.mxu0 %v421
  %648 = vmatpush1.bf16.msra.mxu0 %v420
  %649 = vmatprep.subr.bf16.mxu0 %v429
  %650 = vmatpush1.bf16.msra.mxu0 %v428
  %651 = vmatprep.subr.bf16.mxu0 %v437
  %652 = vmatpush1.bf16.msra.mxu0 %v436
  %653 = vmatprep.subr.bf16.mxu0 %v445
  %654 = vmatpush1.bf16.msra.mxu0 %v444
  %655 = vmatprep.subr.bf16.mxu0 %v453
  %656 = vmatpush1.bf16.msra.mxu0 %v452
  %657 = vmatprep.subr.bf16.mxu0 0
  %658 = vmatpush1.bf16.msra.mxu0 0
  %659 = vmatprep.subr.bf16.mxu0 0
  %660 = vmatpush1.bf16.msra.mxu0 0
  %661 = vmatprep.subr.bf16.mxu0 0
  %662 = vmatpush1.bf16.msra.mxu0 0
  %663 = vmatprep.subr.bf16.mxu0 0
  %664 = vmatpush1.bf16.msra.mxu0 0
  %665 = vmatprep.subr.bf16.mxu0 0
  %666 = vmatpush1.bf16.msra.mxu0 0
  %667 = vmatprep.subr.bf16.mxu0 0
  %668 = vmatpush1.bf16.msra.mxu0 0
  %669 = vmatprep.subr.bf16.mxu0 0
  %670 = vmatpush1.bf16.msra.mxu0 0
  %671 = vmatprep.subr.bf16.mxu0 0
  %672 = vmatpush1.bf16.msra.mxu0 0
  %673 = vmatprep.mubr.bf16.mxu0 0
  %674 = vmatmul.mubr.bf16.gmra.mrb[0].mxu0 %v196
  %v675 = vpop.f32.mrb[0].mxu0
  %v676 = vadd.f32 %v177, %v675
  %v677 = vpop.f32.mrb[0].mxu0
  %v678 = vadd.f32 %v181, %v677
  %v679 = vpop.f32.mrb[0].mxu0
  %v680 = vpop.f32.mrb[0].mxu0
  %681 = vdwg.mxu0
  %v682 = vpack.c.bf16 %v553, %v553
  %v683 = vpack.c.bf16 %v555, %v555
  %v684 = vpack.c.bf16 %v594, %v594
  %v685 = vpack.c.bf16 %v596, %v596
  %v686 = vpack.c.bf16 %v635, %v635
  %v687 = vpack.c.bf16 %v637, %v637
  %v688 = vpack.c.bf16 %v676, %v676
  %v689 = vpack.c.bf16 %v678, %v678
  %v690 = vld [vmem:[%s3] sm:$0xf]
  %v691 = vld [vmem:[%s3 + $0x4] sm:$0xf]
  %v692 = vld [vmem:[%s3 + $0x8] sm:$0xf]
  %v693 = vld [vmem:[%s3 + $0xc] sm:$0xf]
  %v694 = vld [vmem:[%s3 + $0x10] sm:$0xf]
  %v695 = vld [vmem:[%s3 + $0x14] sm:$0xf]
  %v696 = vld [vmem:[%s3 + $0x18] sm:$0xf]
  %v697 = vld [vmem:[%s3 + $0x1c] sm:$0xf]
  %v698 = vld [vmem:[%s3 + $0x20] sm:$0xf]
  %v699 = vld [vmem:[%s3 + $0x24] sm:$0xf]
  %v700 = vld [vmem:[%s3 + $0x28] sm:$0xf]
  %v701 = vld [vmem:[%s3 + $0x2c] sm:$0xf]
  %v702 = vld [vmem:[%s3 + $0x30] sm:$0xf]
  %v703 = vld [vmem:[%s3 + $0x34] sm:$0xf]
  %v704 = vld [vmem:[%s3 + $0x38] sm:$0xf]
  %v705 = vld [vmem:[%s3 + $0x3c] sm:$0xf]
  %v706 = vld [vmem:[%s3 + $0x40] sm:$0xf]
  %v707 = vld [vmem:[%s3 + $0x44] sm:$0xf]
  %v708 = vld [vmem:[%s3 + $0x48] sm:$0xf]
  %v709 = vld [vmem:[%s3 + $0x4c] sm:$0xf]
  %v710 = vld [vmem:[%s3 + $0x50] sm:$0xf]
  %v711 = vld [vmem:[%s3 + $0x54] sm:$0xf]
  %v712 = vld [vmem:[%s3 + $0x58] sm:$0xf]
  %v713 = vld [vmem:[%s3 + $0x5c] sm:$0xf]
  %v714 = vld [vmem:[%s3 + $0x60] sm:$0xf]
  %v715 = vld [vmem:[%s3 + $0x64] sm:$0xf]
  %v716 = vld [vmem:[%s3 + $0x68] sm:$0xf]
  %v717 = vld [vmem:[%s3 + $0x6c] sm:$0xf]
  %v718 = vld [vmem:[%s3 + $0x70] sm:$0xf]
  %v719 = vld [vmem:[%s3 + $0x74] sm:$0xf]
  %v720 = vld [vmem:[%s3 + $0x78] sm:$0xf]
  %v721 = vld [vmem:[%s3 + $0x7c] sm:$0xf]
  %v722 = vld [vmem:[%s3 + $0x80] sm:$0xf]
  %v723 = vld [vmem:[%s3 + $0x84] sm:$0xf]
  %v724 = vld [vmem:[%s3 + $0x88] sm:$0xf]
  %v725 = vld [vmem:[%s3 + $0x8c] sm:$0xf]
  %v726 = vld [vmem:[%s3 + $0x90] sm:$0xf]
  %v727 = vld [vmem:[%s3 + $0x94] sm:$0xf]
  %v728 = vld [vmem:[%s3 + $0x98] sm:$0xf]
  %v729 = vld [vmem:[%s3 + $0x9c] sm:$0xf]
  %v730 = vld [vmem:[%s3 + $0xa0] sm:$0xf]
  %v731 = vld [vmem:[%s3 + $0xa4] sm:$0xf]
  %v732 = vld [vmem:[%s3 + $0xa8] sm:$0xf]
  %v733 = vld [vmem:[%s3 + $0xac] sm:$0xf]
  %v734 = vld [vmem:[%s3 + $0xb0] sm:$0xf]
  %v735 = vld [vmem:[%s3 + $0xb4] sm:$0xf]
  %v736 = vld [vmem:[%s3 + $0xb8] sm:$0xf]
  %v737 = vld [vmem:[%s3 + $0xbc] sm:$0xf]
  %v738 = vld [vmem:[%s3 + $0xc0] sm:$0xf]
  %v739 = vld [vmem:[%s3 + $0xc4] sm:$0xf]
  %v740 = vld [vmem:[%s3 + $0xc8] sm:$0xf]
  %v741 = vld [vmem:[%s3 + $0xcc] sm:$0xf]
  %v742 = vld [vmem:[%s3 + $0xd0] sm:$0xf]
  %v743 = vld [vmem:[%s3 + $0xd4] sm:$0xf]
  %v744 = vld [vmem:[%s3 + $0xd8] sm:$0xf]
  %v745 = vld [vmem:[%s3 + $0xdc] sm:$0xf]
  %v746 = vld [vmem:[%s3 + $0xe0] sm:$0xf]
  %v747 = vld [vmem:[%s3 + $0xe4] sm:$0xf]
  %v748 = vld [vmem:[%s3 + $0xe8] sm:$0xf]
  %v749 = vld [vmem:[%s3 + $0xec] sm:$0xf]
  %v750 = vld [vmem:[%s3 + $0xf0] sm:$0xf]
  %v751 = vld [vmem:[%s3 + $0xf4] sm:$0xf]
  %v752 = vld [vmem:[%s3 + $0xf8] sm:$0xf]
  %v753 = vld [vmem:[%s3 + $0xfc] sm:$0xf]
  %v754 = vld [vmem:[%s3 + $0x100] sm:$0xf]
  %v755 = vld [vmem:[%s3 + $0x104] sm:$0xf]
  %v756 = vld [vmem:[%s3 + $0x108] sm:$0xf]
  %v757 = vld [vmem:[%s3 + $0x10c] sm:$0xf]
  %v758 = vld [vmem:[%s3 + $0x110] sm:$0xf]
  %v759 = vld [vmem:[%s3 + $0x114] sm:$0xf]
  %v760 = vld [vmem:[%s3 + $0x118] sm:$0xf]
  %v761 = vld [vmem:[%s3 + $0x11c] sm:$0xf]
  %v762 = vld [vmem:[%s3 + $0x120] sm:$0xf]
  %v763 = vld [vmem:[%s3 + $0x124] sm:$0xf]
  %v764 = vld [vmem:[%s3 + $0x128] sm:$0xf]
  %v765 = vld [vmem:[%s3 + $0x12c] sm:$0xf]
  %v766 = vld [vmem:[%s3 + $0x130] sm:$0xf]
  %v767 = vld [vmem:[%s3 + $0x134] sm:$0xf]
  %v768 = vld [vmem:[%s3 + $0x138] sm:$0xf]
  %v769 = vld [vmem:[%s3 + $0x13c] sm:$0xf]
  %v770 = vld [vmem:[%s3 + $0x140] sm:$0xf]
  %v771 = vld [vmem:[%s3 + $0x144] sm:$0xf]
  %v772 = vld [vmem:[%s3 + $0x148] sm:$0xf]
  %v773 = vld [vmem:[%s3 + $0x14c] sm:$0xf]
  %v774 = vld [vmem:[%s3 + $0x150] sm:$0xf]
  %v775 = vld [vmem:[%s3 + $0x154] sm:$0xf]
  %v776 = vld [vmem:[%s3 + $0x158] sm:$0xf]
  %v777 = vld [vmem:[%s3 + $0x15c] sm:$0xf]
  %v778 = vld [vmem:[%s3 + $0x160] sm:$0xf]
  %v779 = vld [vmem:[%s3 + $0x164] sm:$0xf]
  %v780 = vld [vmem:[%s3 + $0x168] sm:$0xf]
  %v781 = vld [vmem:[%s3 + $0x16c] sm:$0xf]
  %v782 = vld [vmem:[%s3 + $0x170] sm:$0xf]
  %v783 = vld [vmem:[%s3 + $0x174] sm:$0xf]
  %v784 = vld [vmem:[%s3 + $0x178] sm:$0xf]
  %v785 = vld [vmem:[%s3 + $0x17c] sm:$0xf]
  %v786 = vld [vmem:[%s3 + $0x180] sm:$0xf]
  %v787 = vld [vmem:[%s3 + $0x184] sm:$0xf]
  %v788 = vld [vmem:[%s3 + $0x188] sm:$0xf]
  %v789 = vld [vmem:[%s3 + $0x18c] sm:$0xf]
  %v790 = vld [vmem:[%s3 + $0x190] sm:$0xf]
  %v791 = vld [vmem:[%s3 + $0x194] sm:$0xf]
  %v792 = vld [vmem:[%s3 + $0x198] sm:$0xf]
  %v793 = vld [vmem:[%s3 + $0x19c] sm:$0xf]
  %v794 = vld [vmem:[%s3 + $0x1a0] sm:$0xf]
  %v795 = vld [vmem:[%s3 + $0x1a4] sm:$0xf]
  %v796 = vld [vmem:[%s3 + $0x1a8] sm:$0xf]
  %v797 = vld [vmem:[%s3 + $0x1ac] sm:$0xf]
  %v798 = vld [vmem:[%s3 + $0x1b0] sm:$0xf]
  %v799 = vld [vmem:[%s3 + $0x1b4] sm:$0xf]
  %v800 = vld [vmem:[%s3 + $0x1b8] sm:$0xf]
  %v801 = vld [vmem:[%s3 + $0x1bc] sm:$0xf]
  %v802 = vld [vmem:[%s3 + $0x1c0] sm:$0xf]
  %v803 = vld [vmem:[%s3 + $0x1c4] sm:$0xf]
  %v804 = vld [vmem:[%s3 + $0x1c8] sm:$0xf]
  %v805 = vld [vmem:[%s3 + $0x1cc] sm:$0xf]
  %v806 = vld [vmem:[%s3 + $0x1d0] sm:$0xf]
  %v807 = vld [vmem:[%s3 + $0x1d4] sm:$0xf]
  %v808 = vld [vmem:[%s3 + $0x1d8] sm:$0xf]
  %v809 = vld [vmem:[%s3 + $0x1dc] sm:$0xf]
  %v810 = vld [vmem:[%s3 + $0x1e0] sm:$0xf]
  %v811 = vld [vmem:[%s3 + $0x1e4] sm:$0xf]
  %v812 = vld [vmem:[%s3 + $0x1e8] sm:$0xf]
  %v813 = vld [vmem:[%s3 + $0x1ec] sm:$0xf]
  %v814 = vld [vmem:[%s3 + $0x1f0] sm:$0xf]
  %v815 = vld [vmem:[%s3 + $0x1f4] sm:$0xf]
  %v816 = vld [vmem:[%s3 + $0x1f8] sm:$0xf]
  %v817 = vld [vmem:[%s3 + $0x1fc] sm:$0xf]
  %v818 = vld [vmem:[%s4] sm:$0x1]
  %v820 = vlaneseq
  %v821 = vshrl.u32 %v820, 7
  %v822 = vsub.s32 0, %v821
  %v823 = vrot.slane %v818, %v822
  %v953 = vunpack.c.l.b16 %v690
  %v954 = vunpack.c.l.b16 %v691
  %v955 = vunpack.c.l.b16 %v692
  %v956 = vunpack.c.l.b16 %v693
  %v957 = vunpack.c.l.b16 %v694
  %v958 = vunpack.c.l.b16 %v695
  %v959 = vunpack.c.l.b16 %v696
  %v960 = vunpack.c.l.b16 %v697
  %v961 = vunpack.c.l.b16 %v698
  %v962 = vunpack.c.l.b16 %v699
  %v963 = vunpack.c.l.b16 %v700
  %v964 = vunpack.c.l.b16 %v701
  %v965 = vunpack.c.l.b16 %v702
  %v966 = vunpack.c.l.b16 %v703
  %v967 = vunpack.c.l.b16 %v704
  %v968 = vunpack.c.l.b16 %v705
  %v969 = vunpack.c.l.b16 %v706
  %v970 = vunpack.c.l.b16 %v707
  %v971 = vunpack.c.l.b16 %v708
  %v972 = vunpack.c.l.b16 %v709
  %v973 = vunpack.c.l.b16 %v710
  %v974 = vunpack.c.l.b16 %v711
  %v975 = vunpack.c.l.b16 %v712
  %v976 = vunpack.c.l.b16 %v713
  %v977 = vunpack.c.l.b16 %v714
  %v978 = vunpack.c.l.b16 %v715
  %v979 = vunpack.c.l.b16 %v716
  %v980 = vunpack.c.l.b16 %v717
  %v981 = vunpack.c.l.b16 %v718
  %v982 = vunpack.c.l.b16 %v719
  %v983 = vunpack.c.l.b16 %v720
  %v984 = vunpack.c.l.b16 %v721
  %v985 = vunpack.c.l.b16 %v722
  %v986 = vunpack.c.l.b16 %v723
  %v987 = vunpack.c.l.b16 %v724
  %v988 = vunpack.c.l.b16 %v725
  %v989 = vunpack.c.l.b16 %v726
  %v990 = vunpack.c.l.b16 %v727
  %v991 = vunpack.c.l.b16 %v728
  %v992 = vunpack.c.l.b16 %v729
  %v993 = vunpack.c.l.b16 %v730
  %v994 = vunpack.c.l.b16 %v731
  %v995 = vunpack.c.l.b16 %v732
  %v996 = vunpack.c.l.b16 %v733
  %v997 = vunpack.c.l.b16 %v734
  %v998 = vunpack.c.l.b16 %v735
  %v999 = vunpack.c.l.b16 %v736
  %v1000 = vunpack.c.l.b16 %v737
  %v1001 = vunpack.c.l.b16 %v738
  %v1002 = vunpack.c.l.b16 %v739
  %v1003 = vunpack.c.l.b16 %v740
  %v1004 = vunpack.c.l.b16 %v741
  %v1005 = vunpack.c.l.b16 %v742
  %v1006 = vunpack.c.l.b16 %v743
  %v1007 = vunpack.c.l.b16 %v744
  %v1008 = vunpack.c.l.b16 %v745
  %v1009 = vunpack.c.l.b16 %v746
  %v1010 = vunpack.c.l.b16 %v747
  %v1011 = vunpack.c.l.b16 %v748
  %v1012 = vunpack.c.l.b16 %v749
  %v1013 = vunpack.c.l.b16 %v750
  %v1014 = vunpack.c.l.b16 %v751
  %v1015 = vunpack.c.l.b16 %v752
  %v1016 = vunpack.c.l.b16 %v753
  %v1017 = vunpack.c.l.b16 %v754
  %v1018 = vunpack.c.l.b16 %v755
  %v1019 = vunpack.c.l.b16 %v756
  %v1020 = vunpack.c.l.b16 %v757
  %v1021 = vunpack.c.l.b16 %v758
  %v1022 = vunpack.c.l.b16 %v759
  %v1023 = vunpack.c.l.b16 %v760
  %v1024 = vunpack.c.l.b16 %v761
  %v1025 = vunpack.c.l.b16 %v762
  %v1026 = vunpack.c.l.b16 %v763
  %v1027 = vunpack.c.l.b16 %v764
  %v1028 = vunpack.c.l.b16 %v765
  %v1029 = vunpack.c.l.b16 %v766
  %v1030 = vunpack.c.l.b16 %v767
  %v1031 = vunpack.c.l.b16 %v768
  %v1032 = vunpack.c.l.b16 %v769
  %v1033 = vunpack.c.l.b16 %v770
  %v1034 = vunpack.c.l.b16 %v771
  %v1035 = vunpack.c.l.b16 %v772
  %v1036 = vunpack.c.l.b16 %v773
  %v1037 = vunpack.c.l.b16 %v774
  %v1038 = vunpack.c.l.b16 %v775
  %v1039 = vunpack.c.l.b16 %v776
  %v1040 = vunpack.c.l.b16 %v777
  %v1041 = vunpack.c.l.b16 %v778
  %v1042 = vunpack.c.l.b16 %v779
  %v1043 = vunpack.c.l.b16 %v780
  %v1044 = vunpack.c.l.b16 %v781
  %v1045 = vunpack.c.l.b16 %v782
  %v1046 = vunpack.c.l.b16 %v783
  %v1047 = vunpack.c.l.b16 %v784
  %v1048 = vunpack.c.l.b16 %v785
  %v1049 = vunpack.c.l.b16 %v786
  %v1050 = vunpack.c.l.b16 %v787
  %v1051 = vunpack.c.l.b16 %v788
  %v1052 = vunpack.c.l.b16 %v789
  %v1053 = vunpack.c.l.b16 %v790
  %v1054 = vunpack.c.l.b16 %v791
  %v1055 = vunpack.c.l.b16 %v792
  %v1056 = vunpack.c.l.b16 %v793
  %v1057 = vunpack.c.l.b16 %v794
  %v1058 = vunpack.c.l.b16 %v795
  %v1059 = vunpack.c.l.b16 %v796
  %v1060 = vunpack.c.l.b16 %v797
  %v1061 = vunpack.c.l.b16 %v798
  %v1062 = vunpack.c.l.b16 %v799
  %v1063 = vunpack.c.l.b16 %v800
  %v1064 = vunpack.c.l.b16 %v801
  %v1065 = vunpack.c.l.b16 %v802
  %v1066 = vunpack.c.l.b16 %v803
  %v1067 = vunpack.c.l.b16 %v804
  %v1068 = vunpack.c.l.b16 %v805
  %v1069 = vunpack.c.l.b16 %v806
  %v1070 = vunpack.c.l.b16 %v807
  %v1071 = vunpack.c.l.b16 %v808
  %v1072 = vunpack.c.l.b16 %v809
  %v1073 = vunpack.c.l.b16 %v810
  %v1074 = vunpack.c.l.b16 %v811
  %v1075 = vunpack.c.l.b16 %v812
  %v1076 = vunpack.c.l.b16 %v813
  %v1077 = vunpack.c.l.b16 %v814
  %v1078 = vunpack.c.l.b16 %v815
  %v1079 = vunpack.c.l.b16 %v816
  %v1080 = vunpack.c.l.b16 %v817
  %v1081 = vpack.c.b16 %v954, %v953
  %v1082 = vpack.c.b16 %v956, %v955
  %v1083 = vpack.c.b16 %v958, %v957
  %v1084 = vpack.c.b16 %v960, %v959
  %v1085 = vpack.c.b16 %v962, %v961
  %v1086 = vpack.c.b16 %v964, %v963
  %v1087 = vpack.c.b16 %v966, %v965
  %v1088 = vpack.c.b16 %v968, %v967
  %v1089 = vpack.c.b16 %v970, %v969
  %v1090 = vpack.c.b16 %v972, %v971
  %v1091 = vpack.c.b16 %v974, %v973
  %v1092 = vpack.c.b16 %v976, %v975
  %v1093 = vpack.c.b16 %v978, %v977
  %v1094 = vpack.c.b16 %v980, %v979
  %v1095 = vpack.c.b16 %v982, %v981
  %v1096 = vpack.c.b16 %v984, %v983
  %v1097 = vpack.c.b16 %v986, %v985
  %v1098 = vpack.c.b16 %v988, %v987
  %v1099 = vpack.c.b16 %v990, %v989
  %v1100 = vpack.c.b16 %v992, %v991
  %v1101 = vpack.c.b16 %v994, %v993
  %v1102 = vpack.c.b16 %v996, %v995
  %v1103 = vpack.c.b16 %v998, %v997
  %v1104 = vpack.c.b16 %v1000, %v999
  %v1105 = vpack.c.b16 %v1002, %v1001
  %v1106 = vpack.c.b16 %v1004, %v1003
  %v1107 = vpack.c.b16 %v1006, %v1005
  %v1108 = vpack.c.b16 %v1008, %v1007
  %v1109 = vpack.c.b16 %v1010, %v1009
  %v1110 = vpack.c.b16 %v1012, %v1011
  %v1111 = vpack.c.b16 %v1014, %v1013
  %v1112 = vpack.c.b16 %v1016, %v1015
  %v1113 = vpack.c.b16 %v1018, %v1017
  %v1114 = vpack.c.b16 %v1020, %v1019
  %v1115 = vpack.c.b16 %v1022, %v1021
  %v1116 = vpack.c.b16 %v1024, %v1023
  %v1117 = vpack.c.b16 %v1026, %v1025
  %v1118 = vpack.c.b16 %v1028, %v1027
  %v1119 = vpack.c.b16 %v1030, %v1029
  %v1120 = vpack.c.b16 %v1032, %v1031
  %v1121 = vpack.c.b16 %v1034, %v1033
  %v1122 = vpack.c.b16 %v1036, %v1035
  %v1123 = vpack.c.b16 %v1038, %v1037
  %v1124 = vpack.c.b16 %v1040, %v1039
  %v1125 = vpack.c.b16 %v1042, %v1041
  %v1126 = vpack.c.b16 %v1044, %v1043
  %v1127 = vpack.c.b16 %v1046, %v1045
  %v1128 = vpack.c.b16 %v1048, %v1047
  %v1129 = vpack.c.b16 %v1050, %v1049
  %v1130 = vpack.c.b16 %v1052, %v1051
  %v1131 = vpack.c.b16 %v1054, %v1053
  %v1132 = vpack.c.b16 %v1056, %v1055
  %v1133 = vpack.c.b16 %v1058, %v1057
  %v1134 = vpack.c.b16 %v1060, %v1059
  %v1135 = vpack.c.b16 %v1062, %v1061
  %v1136 = vpack.c.b16 %v1064, %v1063
  %v1137 = vpack.c.b16 %v1066, %v1065
  %v1138 = vpack.c.b16 %v1068, %v1067
  %v1139 = vpack.c.b16 %v1070, %v1069
  %v1140 = vpack.c.b16 %v1072, %v1071
  %v1141 = vpack.c.b16 %v1074, %v1073
  %v1142 = vpack.c.b16 %v1076, %v1075
  %v1143 = vpack.c.b16 %v1078, %v1077
  %v1144 = vpack.c.b16 %v1080, %v1079
  %1209 = vmatprep.subr.bf16.mxu0 0
  %1210 = vmatpush1.bf16.msra.mxu0 %v1081
  %1211 = vmatprep.subr.bf16.mxu0 0
  %1212 = vmatpush1.bf16.msra.mxu0 %v1082
  %1213 = vmatprep.subr.bf16.mxu0 0
  %1214 = vmatpush1.bf16.msra.mxu0 %v1083
  %1215 = vmatprep.subr.bf16.mxu0 0
  %1216 = vmatpush1.bf16.msra.mxu0 %v1084
  %1217 = vmatprep.subr.bf16.mxu0 0
  %1218 = vmatpush1.bf16.msra.mxu0 %v1085
  %1219 = vmatprep.subr.bf16.mxu0 0
  %1220 = vmatpush1.bf16.msra.mxu0 %v1086
  %1221 = vmatprep.subr.bf16.mxu0 0
  %1222 = vmatpush1.bf16.msra.mxu0 %v1087
  %1223 = vmatprep.subr.bf16.mxu0 0
  %1224 = vmatpush1.bf16.msra.mxu0 %v1088
  %1225 = vmatprep.subr.bf16.mxu0 0
  %1226 = vmatpush1.bf16.msra.mxu0 %v1089
  %1227 = vmatprep.subr.bf16.mxu0 0
  %1228 = vmatpush1.bf16.msra.mxu0 %v1090
  %1229 = vmatprep.subr.bf16.mxu0 0
  %1230 = vmatpush1.bf16.msra.mxu0 %v1091
  %1231 = vmatprep.subr.bf16.mxu0 0
  %1232 = vmatpush1.bf16.msra.mxu0 %v1092
  %1233 = vmatprep.subr.bf16.mxu0 0
  %1234 = vmatpush1.bf16.msra.mxu0 %v1093
  %1235 = vmatprep.subr.bf16.mxu0 0
  %1236 = vmatpush1.bf16.msra.mxu0 %v1094
  %1237 = vmatprep.subr.bf16.mxu0 0
  %1238 = vmatpush1.bf16.msra.mxu0 %v1095
  %1239 = vmatprep.subr.bf16.mxu0 0
  %1240 = vmatpush1.bf16.msra.mxu0 %v1096
  %1241 = vmatprep.mubr.bf16.mxu0 %v683
  %1242 = vmatmul.mubr.bf16.gmra.mrb[0].mxu0 %v682
  %v1243 = vpop.f32.mrb[0].mxu0
  %v1244 = vadd.f32 %v823, %v1243
  %v1245 = vpop.f32.mrb[0].mxu0
  %v1246 = vpop.f32.mrb[0].mxu0
  %v1247 = vpop.f32.mrb[0].mxu0
  %1248 = vdwg.mxu0
  %1249 = vmatprep.subr.bf16.mxu0 0
  %1250 = vmatpush1.bf16.msra.mxu0 %v1097
  %1251 = vmatprep.subr.bf16.mxu0 0
  %1252 = vmatpush1.bf16.msra.mxu0 %v1098
  %1253 = vmatprep.subr.bf16.mxu0 0
  %1254 = vmatpush1.bf16.msra.mxu0 %v1099
  %1255 = vmatprep.subr.bf16.mxu0 0
  %1256 = vmatpush1.bf16.msra.mxu0 %v1100
  %1257 = vmatprep.subr.bf16.mxu0 0
  %1258 = vmatpush1.bf16.msra.mxu0 %v1101
  %1259 = vmatprep.subr.bf16.mxu0 0
  %1260 = vmatpush1.bf16.msra.mxu0 %v1102
  %1261 = vmatprep.subr.bf16.mxu0 0
  %1262 = vmatpush1.bf16.msra.mxu0 %v1103
  %1263 = vmatprep.subr.bf16.mxu0 0
  %1264 = vmatpush1.bf16.msra.mxu0 %v1104
  %1265 = vmatprep.subr.bf16.mxu0 0
  %1266 = vmatpush1.bf16.msra.mxu0 %v1105
  %1267 = vmatprep.subr.bf16.mxu0 0
  %1268 = vmatpush1.bf16.msra.mxu0 %v1106
  %1269 = vmatprep.subr.bf16.mxu0 0
  %1270 = vmatpush1.bf16.msra.mxu0 %v1107
  %1271 = vmatprep.subr.bf16.mxu0 0
  %1272 = vmatpush1.bf16.msra.mxu0 %v1108
  %1273 = vmatprep.subr.bf16.mxu0 0
  %1274 = vmatpush1.bf16.msra.mxu0 %v1109
  %1275 = vmatprep.subr.bf16.mxu0 0
  %1276 = vmatpush1.bf16.msra.mxu0 %v1110
  %1277 = vmatprep.subr.bf16.mxu0 0
  %1278 = vmatpush1.bf16.msra.mxu0 %v1111
  %1279 = vmatprep.subr.bf16.mxu0 0
  %1280 = vmatpush1.bf16.msra.mxu0 %v1112
  %1281 = vmatprep.mubr.bf16.mxu0 %v685
  %1282 = vmatmul.mubr.bf16.gmra.mrb[0].mxu0 %v684
  %v1283 = vpop.f32.mrb[0].mxu0
  %v1284 = vadd.f32 %v1244, %v1283
  %v1285 = vpop.f32.mrb[0].mxu0
  %v1286 = vpop.f32.mrb[0].mxu0
  %v1287 = vpop.f32.mrb[0].mxu0
  %1288 = vdwg.mxu0
  %1289 = vmatprep.subr.bf16.mxu0 0
  %1290 = vmatpush1.bf16.msra.mxu0 %v1113
  %1291 = vmatprep.subr.bf16.mxu0 0
  %1292 = vmatpush1.bf16.msra.mxu0 %v1114
  %1293 = vmatprep.subr.bf16.mxu0 0
  %1294 = vmatpush1.bf16.msra.mxu0 %v1115
  %1295 = vmatprep.subr.bf16.mxu0 0
  %1296 = vmatpush1.bf16.msra.mxu0 %v1116
  %1297 = vmatprep.subr.bf16.mxu0 0
  %1298 = vmatpush1.bf16.msra.mxu0 %v1117
  %1299 = vmatprep.subr.bf16.mxu0 0
  %1300 = vmatpush1.bf16.msra.mxu0 %v1118
  %1301 = vmatprep.subr.bf16.mxu0 0
  %1302 = vmatpush1.bf16.msra.mxu0 %v1119
  %1303 = vmatprep.subr.bf16.mxu0 0
  %1304 = vmatpush1.bf16.msra.mxu0 %v1120
  %1305 = vmatprep.subr.bf16.mxu0 0
  %1306 = vmatpush1.bf16.msra.mxu0 %v1121
  %1307 = vmatprep.subr.bf16.mxu0 0
  %1308 = vmatpush1.bf16.msra.mxu0 %v1122
  %1309 = vmatprep.subr.bf16.mxu0 0
  %1310 = vmatpush1.bf16.msra.mxu0 %v1123
  %1311 = vmatprep.subr.bf16.mxu0 0
  %1312 = vmatpush1.bf16.msra.mxu0 %v1124
  %1313 = vmatprep.subr.bf16.mxu0 0
  %1314 = vmatpush1.bf16.msra.mxu0 %v1125
  %1315 = vmatprep.subr.bf16.mxu0 0
  %1316 = vmatpush1.bf16.msra.mxu0 %v1126
  %1317 = vmatprep.subr.bf16.mxu0 0
  %1318 = vmatpush1.bf16.msra.mxu0 %v1127
  %1319 = vmatprep.subr.bf16.mxu0 0
  %1320 = vmatpush1.bf16.msra.mxu0 %v1128
  %1321 = vmatprep.mubr.bf16.mxu0 %v687
  %1322 = vmatmul.mubr.bf16.gmra.mrb[0].mxu0 %v686
  %v1323 = vpop.f32.mrb[0].mxu0
  %v1324 = vadd.f32 %v1284, %v1323
  %v1325 = vpop.f32.mrb[0].mxu0
  %v1326 = vpop.f32.mrb[0].mxu0
  %v1327 = vpop.f32.mrb[0].mxu0
  %1328 = vdwg.mxu0
  %1329 = vmatprep.subr.bf16.mxu0 0
  %1330 = vmatpush1.bf16.msra.mxu0 %v1129
  %1331 = vmatprep.subr.bf16.mxu0 0
  %1332 = vmatpush1.bf16.msra.mxu0 %v1130
  %1333 = vmatprep.subr.bf16.mxu0 0
  %1334 = vmatpush1.bf16.msra.mxu0 %v1131
  %1335 = vmatprep.subr.bf16.mxu0 0
  %1336 = vmatpush1.bf16.msra.mxu0 %v1132
  %1337 = vmatprep.subr.bf16.mxu0 0
  %1338 = vmatpush1.bf16.msra.mxu0 %v1133
  %1339 = vmatprep.subr.bf16.mxu0 0
  %1340 = vmatpush1.bf16.msra.mxu0 %v1134
  %1341 = vmatprep.subr.bf16.mxu0 0
  %1342 = vmatpush1.bf16.msra.mxu0 %v1135
  %1343 = vmatprep.subr.bf16.mxu0 0
  %1344 = vmatpush1.bf16.msra.mxu0 %v1136
  %1345 = vmatprep.subr.bf16.mxu0 0
  %1346 = vmatpush1.bf16.msra.mxu0 %v1137
  %1347 = vmatprep.subr.bf16.mxu0 0
  %1348 = vmatpush1.bf16.msra.mxu0 %v1138
  %1349 = vmatprep.subr.bf16.mxu0 0
  %1350 = vmatpush1.bf16.msra.mxu0 %v1139
  %1351 = vmatprep.subr.bf16.mxu0 0
  %1352 = vmatpush1.bf16.msra.mxu0 %v1140
  %1353 = vmatprep.subr.bf16.mxu0 0
  %1354 = vmatpush1.bf16.msra.mxu0 %v1141
  %1355 = vmatprep.subr.bf16.mxu0 0
  %1356 = vmatpush1.bf16.msra.mxu0 %v1142
  %1357 = vmatprep.subr.bf16.mxu0 0
  %1358 = vmatpush1.bf16.msra.mxu0 %v1143
  %1359 = vmatprep.subr.bf16.mxu0 0
  %1360 = vmatpush1.bf16.msra.mxu0 %v1144
  %1361 = vmatprep.mubr.bf16.mxu0 %v689
  %1362 = vmatmul.mubr.bf16.gmra.mrb[0].mxu0 %v688
  %v1363 = vpop.f32.mrb[0].mxu0
  %v1364 = vadd.f32 %v1324, %v1363
  %v1365 = vpop.f32.mrb[0].mxu0
  %v1366 = vpop.f32.mrb[0].mxu0
  %v1367 = vpop.f32.mrb[0].mxu0
  %1368 = vdwg.mxu0
  %v1369 = vlaneseq
  %v1370 = vand.u32 %v1369, 127
  %vm1371 = vcmp.eq.s32.totalorder %v1370, 4
  %v1372 = vxor.u32 %v1364, 2147483648
  %v1373 = vmul.f32 %v1372, 1.442695
  %v1374 = vpow.pop %v1373
  %v1375 = vadd.f32 %v1374, 1.0
  %v1376 = vrcp.pop %v1375
  %v1377 = vmul.f32 1.0, %v1376
  %v1378 = vsel %vm1371, %v1377, %v1364
  %1379 = vst [vmem:[%s5] sm:$0x3] %v1378
  // Predicated region
  $region22: #{mask_detector_forward.3} parent=0 // pred_check
    _
  $region23: #{mask_detector_forward.3} parent=0 // pred_check_branch
    %1381 = sbr.rel (0) target = $region25
  $region24: #{mask_detector_forward.3} parent=0 // pred_region
    _
  $region25: #{mask_detector_forward.3} parent=0 // pred_fallthru
    _
  // Predicated region
  $region26: #{mask_detector_forward.3} parent=0 // pred_check
    _
  $region27: #{mask_detector_forward.3} parent=0 // pred_check_branch
    %1383 = sbr.rel (0) target = $region29
  $region28: #{mask_detector_forward.3} parent=0 // pred_region
    _
  $region29: #{mask_detector_forward.3} parent=0 // pred_fallthru
    _

</llo_original>
